<compile_context>
chip_gen: v7x
topology: tpu7x:2x2x1
jax: 0.10.0
libtpu: 0.0.40
codegen_flags: <defaults>
</compile_context>

<pallas_src>
import functools

import jax
import jax.numpy as jnp
from jax.experimental import pallas as pl
from jax.experimental.pallas import tpu as pltpu


def _round_up(x, m):
    return (x + m - 1) // m * m


def _vmem_capacity_bytes():
    """Per-TensorCore VMEM capacity (128 MiB v5e/v6e, 64 MiB v7x)."""
    try:
        cap = int(pltpu.get_tpu_info().vmem_capacity_bytes)
    except Exception:
        cap = 64 * 1024 * 1024  # conservative fallback = v7x per-core VMEM
    # Guard against nonsense values.
    return min(max(cap, 32 * 1024 * 1024), 128 * 1024 * 1024)


def _plan_blocks(n_cls, n_ctx, suf_len, ctx_dim, itemsize):
    """Pick (classes per grid step, vmem_limit_bytes) from real VMEM layout.

    Every pipelined block is double-buffered; second-to-last dims pad to the
    dtype sublane tile and the last dim pads to 128 lanes.
    """
    seq_len = 1 + n_ctx + suf_len
    vmem_cap = _vmem_capacity_bytes()
    # Scoped limit: ~3/4 of physical (96 MiB on 128 MiB chips, 48 MiB on v7x),
    # never below the 32 MiB that is safe everywhere.
    vmem_limit = max(min(vmem_cap * 3 // 4, vmem_cap - 16 * 1024 * 1024),
                     32 * 1024 * 1024)
    # Leave headroom inside the limit for Mosaic internal scratch.
    data_budget = vmem_limit - 8 * 1024 * 1024

    sub = 8 * max(1, 4 // itemsize)          # sublane tile: 8 f32, 16 bf16/fp16
    lane_dim = _round_up(ctx_dim, 128)        # lane tile
    per_class = 2 * (_round_up(1, sub)        # prefix block   (double-buffered)
                     + _round_up(suf_len, sub)  # suffix block
                     + _round_up(seq_len, sub)  # output block
                     ) * lane_dim * itemsize
    ctx_fixed = 2 * _round_up(n_ctx, sub) * lane_dim * itemsize  # resident ctx

    c_blk = max(1, (data_budget - ctx_fixed) // per_class)
    return int(min(c_blk, n_cls)), int(vmem_limit)


def _prompt_assembly_kernel(prefix_ref, ctx_ref, suffix_ref, out_ref, *,
                            n_ctx, out_dtype):
    # prefix_ref: (c_blk, 1, ctx_dim)        per-class SOS embeddings
    # ctx_ref:    (n_ctx, ctx_dim)           shared, resident across the grid
    # suffix_ref: (c_blk, suf_len, ctx_dim)  per-class name/EOS/pad embeddings
    # out_ref:    (c_blk, seq_len, ctx_dim)
    c_blk = out_ref.shape[0]
    ctx_dim = out_ref.shape[2]
    # Three direct slice stores into the pipelined output buffer — no
    # jnp.concatenate, so no extra VMEM assembly pass over the output block.
    out_ref[:, 0:1, :] = prefix_ref[...].astype(out_dtype)
    out_ref[:, 1:1 + n_ctx, :] = jnp.broadcast_to(
        ctx_ref[...].astype(out_dtype)[None, :, :], (c_blk, n_ctx, ctx_dim))
    out_ref[:, 1 + n_ctx:, :] = suffix_ref[...].astype(out_dtype)


def prompt_learner_forward(ctx, token_prefix, token_suffix, *, class_block=None):
    """prompts = cat([prefix, ctx (broadcast over classes), suffix], dim=-2)."""
    n_cls, pre_len, ctx_dim = token_prefix.shape
    assert pre_len == 1
    n_ctx, ctx_dim_c = ctx.shape
    assert ctx_dim_c == ctx_dim
    n_cls_s, suf_len, ctx_dim_s = token_suffix.shape
    assert n_cls_s == n_cls and ctx_dim_s == ctx_dim
    seq_len = 1 + n_ctx + suf_len

    # torch.cat / jnp.concatenate dtype promotion (don't silently downcast a
    # float32 learned ctx to half-precision frozen embeddings).
    out_dtype = jnp.result_type(ctx.dtype, token_prefix.dtype, token_suffix.dtype)
    itemsize = max(jnp.dtype(out_dtype).itemsize,
                   jnp.dtype(ctx.dtype).itemsize,
                   jnp.dtype(token_prefix.dtype).itemsize,
                   jnp.dtype(token_suffix.dtype).itemsize)

    auto_blk, vmem_limit = _plan_blocks(n_cls, n_ctx, suf_len, ctx_dim, itemsize)
    c_blk = int(class_block) if class_block is not None else auto_blk
    c_blk = max(1, min(c_blk, n_cls))
    grid = (pl.cdiv(n_cls, c_blk),)  # tail block (n_cls % c_blk) masked by Pallas

    kernel = functools.partial(_prompt_assembly_kernel,
                               n_ctx=n_ctx, out_dtype=out_dtype)

    return pl.pallas_call(
        kernel,
        out_shape=jax.ShapeDtypeStruct((n_cls, seq_len, ctx_dim), out_dtype),
        grid_spec=pltpu.PrefetchScalarGridSpec(
            num_scalar_prefetch=0,
            grid=grid,
            in_specs=[
                # prefix rows for this class block
                pl.BlockSpec((c_blk, 1, ctx_dim), lambda i: (i, 0, 0)),
                # shared ctx: constant block index -> fetched once, stays resident
                pl.BlockSpec((n_ctx, ctx_dim), lambda i: (0, 0)),
                # suffix rows for this class block
                pl.BlockSpec((c_blk, suf_len, ctx_dim), lambda i: (i, 0, 0)),
            ],
            out_specs=pl.BlockSpec((c_blk, seq_len, ctx_dim), lambda i: (i, 0, 0)),
        ),
        compiler_params=pltpu.CompilerParams(
            dimension_semantics=("parallel",),   # lets megacore shard classes
            vmem_limit_bytes=vmem_limit,         # chip-aware scoped-VMEM limit
        ),
    )(token_prefix, ctx, token_suffix)


def prompt_learner_reference(ctx, token_prefix, token_suffix):
    n_cls = token_prefix.shape[0]
    ctx_b = jnp.broadcast_to(ctx[None, :, :], (n_cls,) + ctx.shape)
    return jnp.concatenate([token_prefix, ctx_b, token_suffix], axis=1)


if __name__ == "__main__":
    # Small but CLIP-consistent shapes:
    #   n_cls classes, n_ctx=16 learnable context tokens (module default),
    #   ctx_dim=512 (ViT-B CLIP text width), total prompt length 77
    #   => suf_len = 77 - 1 - n_ctx = 60 (class-name tokens + EOS + padding).
    n_cls = 10
    n_ctx = 16
    ctx_dim = 512
    suf_len = 60

    key = jax.random.PRNGKey(0)
    k_ctx, k_pre, k_suf = jax.random.split(key, 3)

    # nn.init.normal_(ctx_vectors, std=0.02); frozen CLIP token embeddings.
    ctx = (0.02 * jax.random.normal(k_ctx, (n_ctx, ctx_dim))).astype(jnp.float32)
    token_prefix = jax.random.normal(k_pre, (n_cls, 1, ctx_dim)).astype(jnp.float32)
    token_suffix = jax.random.normal(k_suf, (n_cls, suf_len, ctx_dim)).astype(jnp.float32)

    # 1) Auto-sized class block (covers the single-step fast path).
    prompts = jax.block_until_ready(
        prompt_learner_forward(ctx, token_prefix, token_suffix))
    ref = prompt_learner_reference(ctx, token_prefix, token_suffix)
    assert prompts.shape == (n_cls, 1 + n_ctx + suf_len, ctx_dim), prompts.shape
    assert prompts.dtype == ref.dtype
    assert jnp.array_equal(prompts, ref), "mismatch vs reference (auto block)"

    # 2) Non-divisible class block -> grid of 3 with a masked tail block of 2
    #    classes; verifies the padded tail rows are not written back.
    prompts_tail = jax.block_until_ready(
        prompt_learner_forward(ctx, token_prefix, token_suffix, class_block=4))
    assert jnp.array_equal(prompts_tail, ref), "mismatch vs reference (tail block)"

    # 3) Mixed dtypes: bf16 frozen embeddings + f32 learned ctx must promote to
    #    f32 exactly like jnp.concatenate / torch.cat.
    pre_bf16 = token_prefix.astype(jnp.bfloat16)
    suf_bf16 = token_suffix.astype(jnp.bfloat16)
    prompts_mixed = jax.block_until_ready(
        prompt_learner_forward(ctx, pre_bf16, suf_bf16, class_block=3))
    ref_mixed = prompt_learner_reference(ctx, pre_bf16, suf_bf16)
    assert prompts_mixed.dtype == ref_mixed.dtype == jnp.float32
    assert jnp.array_equal(prompts_mixed, ref_mixed), "mismatch vs reference (mixed dtype)"

    print("KERNEL_OK")
</pallas_src>

<mosaic_0001>
module attributes {stable_mosaic.version = 11 : i64} {
  func.func @_prompt_assembly_kernel(%arg0: i32, %arg1: memref<10x1x512xf32, #tpu.memory_space<vmem>>, %arg2: memref<16x512xf32, #tpu.memory_space<vmem>>, %arg3: memref<10x60x512xf32, #tpu.memory_space<vmem>>, %arg4: memref<10x77x512xf32, #tpu.memory_space<vmem>>) attributes {dimension_semantics = [#tpu.dimension_semantics<parallel>], iteration_bounds = array<i64: 1>, scalar_prefetch = 0 : i64, scratch_operands = 0 : i64, tpu.core_type = #tpu.core_type<tc>, window_params = [{transform_indices = @transform_0, window_bounds = array<i64: 10, 1, 512>}, {pipeline_mode = #tpu.pipeline_mode<synchronous>, transform_indices = @transform_1, window_bounds = array<i64: 16, 512>}, {transform_indices = @transform_2, window_bounds = array<i64: 10, 60, 512>}, {transform_indices = @transform_3, window_bounds = array<i64: 10, 77, 512>}]} {
    %c0 = arith.constant 0 : index
    %c0_0 = arith.constant 0 : index
    %c0_1 = arith.constant 0 : index
    %0 = vector.load %arg1[%c0, %c0_0, %c0_1] : memref<10x1x512xf32, #tpu.memory_space<vmem>>, vector<10x1x512xf32>
    %c0_2 = arith.constant 0 : index
    %c0_3 = arith.constant 0 : index
    %c0_4 = arith.constant 0 : index
    %1 = vector.load %arg4[%c0_2, %c0_3, %c0_4] : memref<10x77x512xf32, #tpu.memory_space<vmem>>, vector<10x1x512xf32>
    tpu.vector_store %arg4[%c0_2, %c0_3, %c0_4], %0 {strides = array<i32>} : memref<10x77x512xf32, #tpu.memory_space<vmem>>, vector<10x1x512xf32>,
    %c0_5 = arith.constant 0 : index
    %c0_6 = arith.constant 0 : index
    %2 = vector.load %arg2[%c0_5, %c0_6] : memref<16x512xf32, #tpu.memory_space<vmem>>, vector<16x512xf32>
    %3 = vector.shape_cast %2 : vector<16x512xf32> to vector<1x16x512xf32>
    %4 = vector.shape_cast %3 : vector<1x16x512xf32> to vector<1x16x512xf32>
    %5 = vector.broadcast %4 : vector<1x16x512xf32> to vector<10x16x512xf32>
    %c0_7 = arith.constant 0 : index
    %c1 = arith.constant 1 : index
    %c0_8 = arith.constant 0 : index
    %6 = vector.load %arg4[%c0_7, %c1, %c0_8] : memref<10x77x512xf32, #tpu.memory_space<vmem>>, vector<10x16x512xf32>
    tpu.vector_store %arg4[%c0_7, %c1, %c0_8], %5 {strides = array<i32>} : memref<10x77x512xf32, #tpu.memory_space<vmem>>, vector<10x16x512xf32>,
    %c0_9 = arith.constant 0 : index
    %c0_10 = arith.constant 0 : index
    %c0_11 = arith.constant 0 : index
    %7 = vector.load %arg3[%c0_9, %c0_10, %c0_11] : memref<10x60x512xf32, #tpu.memory_space<vmem>>, vector<10x60x512xf32>
    %c0_12 = arith.constant 0 : index
    %c17 = arith.constant 17 : index
    %c0_13 = arith.constant 0 : index
    %8 = vector.load %arg4[%c0_12, %c17, %c0_13] : memref<10x77x512xf32, #tpu.memory_space<vmem>>, vector<10x60x512xf32>
    tpu.vector_store %arg4[%c0_12, %c17, %c0_13], %7 {strides = array<i32>} : memref<10x77x512xf32, #tpu.memory_space<vmem>>, vector<10x60x512xf32>,
    return
  }
  func.func @transform_0(%arg0: i32) -> (i32, i32, i32) {
    %c0_i32 = arith.constant 0 : i32
    %c0_i32_0 = arith.constant 0 : i32
    %c0_i32_1 = arith.constant 0 : i32
    return %arg0, %c0_i32, %c0_i32_0 : i32, i32, i32
  }
  func.func @transform_1(%arg0: i32) -> (i32, i32) {
    %c0_i32 = arith.constant 0 : i32
    %c0_i32_0 = arith.constant 0 : i32
    %c0_i32_1 = arith.constant 0 : i32
    return %c0_i32, %c0_i32_0 : i32, i32
  }
  func.func @transform_2(%arg0: i32) -> (i32, i32, i32) {
    %c0_i32 = arith.constant 0 : i32
    %c0_i32_0 = arith.constant 0 : i32
    %c0_i32_1 = arith.constant 0 : i32
    return %arg0, %c0_i32, %c0_i32_0 : i32, i32, i32
  }
  func.func @transform_3(%arg0: i32) -> (i32, i32, i32) {
    %c0_i32 = arith.constant 0 : i32
    %c0_i32_0 = arith.constant 0 : i32
    %c0_i32_1 = arith.constant 0 : i32
    return %arg0, %c0_i32, %c0_i32_0 : i32, i32, i32
  }
}

</mosaic_0001>

<llo_original>
// kernel: tpu_custom_call.1
$region0: #{tpu_custom_call.1}
  #allocation0 [shape = 'u32[]', space=smem, size = 0x4, offset = 0x4, fixed_abs, tag = 'smem constant byte address 0x4 - core index']
  #allocation1 [shape = 'u32[144,128]{1,0:T(1,128)}', space=vmem, size = 0x12000, scoped, tag = 'internal scratch']
  %s0 = inlined_call_operand.hbm [shape: f32[10,1,512], index: 0, kind: input, shape index: {}]
  %s1 = inlined_call_operand.hbm [shape: f32[16,512], index: 1, kind: input, shape index: {}]
  %s2 = inlined_call_operand.hbm [shape: f32[10,60,512], index: 2, kind: input, shape index: {}]
  %s3 = inlined_call_operand.hbm [shape: f32[10,77,512], index: 3, kind: output, shape index: {}]
  %s4 = sld [smem:[#allocation0]]
  $region34: #{tpu_custom_call.1} parent=0
    _
  %s6 = ssub.s32 1, %s4
  %s7 = scalar_select 0, %s6, %s4
  $region1: #{tpu_custom_call.1} parent=0
    #allocation2 [shape = 'u8[20480]{0}', space=vmem, size = 0x5000, scoped, tag = 'input window, operand 0, single buffered']
    #allocation3 [shape = 's32[1]{0}', space=sflag, size = 0x4, scoped, tag = 'scoped memory for tpu_custom_call.1']
    #allocation4 [shape = 's32[1]{0}', space=sflag, size = 0x4, scoped, tag = 'scoped memory for tpu_custom_call.1']
    #allocation5 [shape = 'u8[32768]{0}', space=vmem, size = 0x8000, scoped, tag = 'input window, operand 1, single buffered']
    #allocation6 [shape = 's32[1]{0}', space=sflag, size = 0x4, scoped, tag = 'scoped memory for tpu_custom_call.1']
    #allocation7 [shape = 'u8[1310720]{0}', space=vmem, size = 0x140000, scoped, tag = 'input window, operand 2, single buffered']
    #allocation8 [shape = 'u8[1638400]{0}', space=vmem, size = 0x190000, scoped, tag = 'output window, operand 0, single buffered']
    %8 = vsyncpa [#allocation3], 0
    %9 = vsyncpa [#allocation6], 0
    %10 = vsyncpa [#allocation4], 0
    // Predicated region
    $region2: #{tpu_custom_call.1} parent=1 // pred_check
      _
    $region3: #{tpu_custom_call.1} parent=1 // pred_check_branch
      %12 = sbr.rel (0) target = $region5
    $region4: #{tpu_custom_call.1} parent=1 // pred_region
      %s14 = ssub.s32 640, 640
      %15 = vsyncadd [#allocation3], %s14
      %s16 = sshll.u32 [#allocation2], 4
      %s17 = int_to_ptr.vmem [resolvable:$true] %s16
      %22 = dma.hbm_to_vmem [thread:$0]  %s0, 640, %s17, [#allocation3], 64, 64, 4
    $region5: #{tpu_custom_call.1} parent=1 // pred_fallthru
      _
    // Predicated region
    $region6: #{tpu_custom_call.1} parent=1 // pred_check
      _
    $region7: #{tpu_custom_call.1} parent=1 // pred_check_branch
      %24 = sbr.rel (0) target = $region9
    $region8: #{tpu_custom_call.1} parent=1 // pred_region
      %s26 = ssub.s32 1024, 1024
      %27 = vsyncadd [#allocation6], %s26
      %s28 = sshll.u32 [#allocation5], 4
      %s29 = int_to_ptr.vmem [resolvable:$true] %s28
      %34 = dma.hbm_to_vmem [thread:$0]  %s1, 1024, %s29, [#allocation6], 512, 512, 32
    $region9: #{tpu_custom_call.1} parent=1 // pred_fallthru
      _
    // Predicated region
    $region10: #{tpu_custom_call.1} parent=1 // pred_check
      _
    $region11: #{tpu_custom_call.1} parent=1 // pred_check_branch
      %36 = sbr.rel (0) target = $region13
    $region12: #{tpu_custom_call.1} parent=1 // pred_region
      %s38 = ssub.s32 40960, 40960
      %39 = vsyncadd [#allocation6], %s38
      %s40 = sshll.u32 [#allocation7], 4
      %s41 = int_to_ptr.vmem [resolvable:$true] %s40
      %46 = dma.hbm_to_vmem [thread:$0]  %s2, 40960, %s41, [#allocation6], 512, 512, 32
    $region13: #{tpu_custom_call.1} parent=1 // pred_fallthru
      _
    // Predicated region
    $region14: #{tpu_custom_call.1} parent=1 // pred_check
      _
    $region15: #{tpu_custom_call.1} parent=1 // pred_check_branch
      %48 = sbr.rel (0) target = $region17
    $region16: #{tpu_custom_call.1} parent=1 // pred_region
      %49 = dma.done [#allocation3], 640
    $region17: #{tpu_custom_call.1} parent=1 // pred_fallthru
      _
    // Predicated region
    $region18: #{tpu_custom_call.1} parent=1 // pred_check
      _
    $region19: #{tpu_custom_call.1} parent=1 // pred_check_branch
      %51 = sbr.rel (0) target = $region21
    $region20: #{tpu_custom_call.1} parent=1 // pred_region
      %52 = dma.done [#allocation6], 1024
    $region21: #{tpu_custom_call.1} parent=1 // pred_fallthru
      _
    // Predicated region
    $region22: #{tpu_custom_call.1} parent=1 // pred_check
      _
    $region23: #{tpu_custom_call.1} parent=1 // pred_check_branch
      %54 = sbr.rel (0) target = $region25
    $region24: #{tpu_custom_call.1} parent=1 // pred_region
      %55 = dma.done [#allocation6], 40960
    $region25: #{tpu_custom_call.1} parent=1 // pred_fallthru
      _
    %v56 = vld [vmem:[#allocation2] sm:$0xf]
    %v57 = vld [vmem:[#allocation2 + $0x4] sm:$0xf]
    %v58 = vld [vmem:[#allocation2 + $0x8] sm:$0xf]
    %v59 = vld [vmem:[#allocation2 + $0xc] sm:$0xf]
    %v60 = vld [vmem:[#allocation2 + $0x10] sm:$0xf]
    %v61 = vld [vmem:[#allocation2 + $0x14] sm:$0xf]
    %v62 = vld [vmem:[#allocation2 + $0x18] sm:$0xf]
    %v63 = vld [vmem:[#allocation2 + $0x1c] sm:$0xf]
    %v64 = vld [vmem:[#allocation2 + $0x20] sm:$0xf]
    %v65 = vld [vmem:[#allocation2 + $0x24] sm:$0xf]
    %v66 = vlaneseq
    %vm67 = vcmp.ge.s32.totalorder %v66, 0
    %vm68 = vcmp.lt.s32.totalorder %v66, 512
    %vm69 = vmand %vm67, %vm68
    %70 = vst.msk [vmem:[#allocation8] ss:$8 sm:$0xf] %vm69, %v56
    %71 = vst.msk [vmem:[#allocation8] ss:$8 sm:$0x0] %vm69, %v56
    %s72 = scalar_lea.vmem [#allocation8], 320
    %73 = vst.msk [vmem:[%s72] ss:$8 sm:$0xf] %vm69, %v57
    %74 = vst.msk [vmem:[%s72] ss:$8 sm:$0x0] %vm69, %v57
    %s75 = scalar_lea.vmem [#allocation8], 640
    %76 = vst.msk [vmem:[%s75] ss:$8 sm:$0xf] %vm69, %v58
    %77 = vst.msk [vmem:[%s75] ss:$8 sm:$0x0] %vm69, %v58
    %s78 = scalar_lea.vmem [#allocation8], 960
    %79 = vst.msk [vmem:[%s78] ss:$8 sm:$0xf] %vm69, %v59
    %80 = vst.msk [vmem:[%s78] ss:$8 sm:$0x0] %vm69, %v59
    %s81 = scalar_lea.vmem [#allocation8], 1280
    %82 = vst.msk [vmem:[%s81] ss:$8 sm:$0xf] %vm69, %v60
    %83 = vst.msk [vmem:[%s81] ss:$8 sm:$0x0] %vm69, %v60
    %s84 = scalar_lea.vmem [#allocation8], 1600
    %85 = vst.msk [vmem:[%s84] ss:$8 sm:$0xf] %vm69, %v61
    %86 = vst.msk [vmem:[%s84] ss:$8 sm:$0x0] %vm69, %v61
    %s87 = scalar_lea.vmem [#allocation8], 1920
    %88 = vst.msk [vmem:[%s87] ss:$8 sm:$0xf] %vm69, %v62
    %89 = vst.msk [vmem:[%s87] ss:$8 sm:$0x0] %vm69, %v62
    %s90 = scalar_lea.vmem [#allocation8], 2240
    %91 = vst.msk [vmem:[%s90] ss:$8 sm:$0xf] %vm69, %v63
    %92 = vst.msk [vmem:[%s90] ss:$8 sm:$0x0] %vm69, %v63
    %s93 = scalar_lea.vmem [#allocation8], 2560
    %94 = vst.msk [vmem:[%s93] ss:$8 sm:$0xf] %vm69, %v64
    %95 = vst.msk [vmem:[%s93] ss:$8 sm:$0x0] %vm69, %v64
    %s96 = scalar_lea.vmem [#allocation8], 2880
    %97 = vst.msk [vmem:[%s96] ss:$8 sm:$0xf] %vm69, %v65
    %98 = vst.msk [vmem:[%s96] ss:$8 sm:$0x0] %vm69, %v65
    %v99 = vld [vmem:[#allocation5] sm:$0xff]
    %v100 = vld [vmem:[#allocation5 + $0x8] sm:$0xff]
    %v101 = vld [vmem:[#allocation5 + $0x10] sm:$0xff]
    %v102 = vld [vmem:[#allocation5 + $0x18] sm:$0xff]
    %v103 = vld [vmem:[#allocation5 + $0x20] sm:$0xff]
    %v104 = vld [vmem:[#allocation5 + $0x28] sm:$0xff]
    %v105 = vld [vmem:[#allocation5 + $0x30] sm:$0xff]
    %v106 = vld [vmem:[#allocation5 + $0x38] sm:$0xff]
    %vm115 = vcmask 1040384
    %v116 = vrot.slane %v99, 7
    %v117 = vrot.slane %v100, 7
    %v118 = vrot.slane %v101, 7
    %v119 = vrot.slane %v102, 7
    %v120 = vrot.slane %v103, 7
    %v121 = vsel %vm115, %v116, %v120
    %v122 = vrot.slane %v104, 7
    %v123 = vsel %vm115, %v117, %v122
    %v124 = vrot.slane %v105, 7
    %v125 = vsel %vm115, %v118, %v124
    %v126 = vrot.slane %v106, 7
    %v127 = vsel %vm115, %v119, %v126
    %140 = vst [vmem:[#allocation8] sm:$0xfe] %v116
    %141 = vst [vmem:[#allocation8 + $0x8] sm:$0xfe] %v117
    %142 = vst [vmem:[#allocation8 + $0x10] sm:$0xfe] %v118
    %143 = vst [vmem:[#allocation8 + $0x18] sm:$0xfe] %v119
    %144 = vst [vmem:[#allocation8 + $0x20] sm:$0xff] %v121
    %145 = vst [vmem:[#allocation8 + $0x28] sm:$0xff] %v123
    %146 = vst [vmem:[#allocation8 + $0x30] sm:$0xff] %v125
    %147 = vst [vmem:[#allocation8 + $0x38] sm:$0xff] %v127
    %148 = vst [vmem:[#allocation8 + $0x40] sm:$0x1] %v120
    %149 = vst [vmem:[#allocation8 + $0x48] sm:$0x1] %v122
    %150 = vst [vmem:[#allocation8 + $0x50] sm:$0x1] %v124
    %151 = vst [vmem:[#allocation8 + $0x58] sm:$0x1] %v126
    %152 = vst [vmem:[#allocation8 + $0x140] sm:$0xfe] %v116
    %153 = vst [vmem:[#allocation8 + $0x148] sm:$0xfe] %v117
    %154 = vst [vmem:[#allocation8 + $0x150] sm:$0xfe] %v118
    %155 = vst [vmem:[#allocation8 + $0x158] sm:$0xfe] %v119
    %156 = vst [vmem:[#allocation8 + $0x160] sm:$0xff] %v121
    %157 = vst [vmem:[#allocation8 + $0x168] sm:$0xff] %v123
    %158 = vst [vmem:[#allocation8 + $0x170] sm:$0xff] %v125
    %159 = vst [vmem:[#allocation8 + $0x178] sm:$0xff] %v127
    %160 = vst [vmem:[#allocation8 + $0x180] sm:$0x1] %v120
    %161 = vst [vmem:[#allocation8 + $0x188] sm:$0x1] %v122
    %162 = vst [vmem:[#allocation8 + $0x190] sm:$0x1] %v124
    %163 = vst [vmem:[#allocation8 + $0x198] sm:$0x1] %v126
    %164 = vst [vmem:[#allocation8 + $0x280] sm:$0xfe] %v116
    %165 = vst [vmem:[#allocation8 + $0x288] sm:$0xfe] %v117
    %166 = vst [vmem:[#allocation8 + $0x290] sm:$0xfe] %v118
    %167 = vst [vmem:[#allocation8 + $0x298] sm:$0xfe] %v119
    %168 = vst [vmem:[#allocation8 + $0x2a0] sm:$0xff] %v121
    %169 = vst [vmem:[#allocation8 + $0x2a8] sm:$0xff] %v123
    %170 = vst [vmem:[#allocation8 + $0x2b0] sm:$0xff] %v125
    %171 = vst [vmem:[#allocation8 + $0x2b8] sm:$0xff] %v127
    %172 = vst [vmem:[#allocation8 + $0x2c0] sm:$0x1] %v120
    %173 = vst [vmem:[#allocation8 + $0x2c8] sm:$0x1] %v122
    %174 = vst [vmem:[#allocation8 + $0x2d0] sm:$0x1] %v124
    %175 = vst [vmem:[#allocation8 + $0x2d8] sm:$0x1] %v126
    %176 = vst [vmem:[#allocation8 + $0x3c0] sm:$0xfe] %v116
    %177 = vst [vmem:[#allocation8 + $0x3c8] sm:$0xfe] %v117
    %178 = vst [vmem:[#allocation8 + $0x3d0] sm:$0xfe] %v118
    %179 = vst [vmem:[#allocation8 + $0x3d8] sm:$0xfe] %v119
    %180 = vst [vmem:[#allocation8 + $0x3e0] sm:$0xff] %v121
    %181 = vst [vmem:[#allocation8 + $0x3e8] sm:$0xff] %v123
    %182 = vst [vmem:[#allocation8 + $0x3f0] sm:$0xff] %v125
    %183 = vst [vmem:[#allocation8 + $0x3f8] sm:$0xff] %v127
    %184 = vst [vmem:[#allocation8 + $0x400] sm:$0x1] %v120
    %185 = vst [vmem:[#allocation8 + $0x408] sm:$0x1] %v122
    %186 = vst [vmem:[#allocation8 + $0x410] sm:$0x1] %v124
    %187 = vst [vmem:[#allocation8 + $0x418] sm:$0x1] %v126
    %188 = vst [vmem:[#allocation8 + $0x500] sm:$0xfe] %v116
    %189 = vst [vmem:[#allocation8 + $0x508] sm:$0xfe] %v117
    %190 = vst [vmem:[#allocation8 + $0x510] sm:$0xfe] %v118
    %191 = vst [vmem:[#allocation8 + $0x518] sm:$0xfe] %v119
    %192 = vst [vmem:[#allocation8 + $0x520] sm:$0xff] %v121
    %193 = vst [vmem:[#allocation8 + $0x528] sm:$0xff] %v123
    %194 = vst [vmem:[#allocation8 + $0x530] sm:$0xff] %v125
    %195 = vst [vmem:[#allocation8 + $0x538] sm:$0xff] %v127
    %196 = vst [vmem:[#allocation8 + $0x540] sm:$0x1] %v120
    %197 = vst [vmem:[#allocation8 + $0x548] sm:$0x1] %v122
    %198 = vst [vmem:[#allocation8 + $0x550] sm:$0x1] %v124
    %199 = vst [vmem:[#allocation8 + $0x558] sm:$0x1] %v126
    %200 = vst [vmem:[#allocation8 + $0x640] sm:$0xfe] %v116
    %201 = vst [vmem:[#allocation8 + $0x648] sm:$0xfe] %v117
    %202 = vst [vmem:[#allocation8 + $0x650] sm:$0xfe] %v118
    %203 = vst [vmem:[#allocation8 + $0x658] sm:$0xfe] %v119
    %204 = vst [vmem:[#allocation8 + $0x660] sm:$0xff] %v121
    %205 = vst [vmem:[#allocation8 + $0x668] sm:$0xff] %v123
    %206 = vst [vmem:[#allocation8 + $0x670] sm:$0xff] %v125
    %207 = vst [vmem:[#allocation8 + $0x678] sm:$0xff] %v127
    %208 = vst [vmem:[#allocation8 + $0x680] sm:$0x1] %v120
    %209 = vst [vmem:[#allocation8 + $0x688] sm:$0x1] %v122
    %210 = vst [vmem:[#allocation8 + $0x690] sm:$0x1] %v124
    %211 = vst [vmem:[#allocation8 + $0x698] sm:$0x1] %v126
    %212 = vst [vmem:[#allocation8 + $0x780] sm:$0xfe] %v116
    %213 = vst [vmem:[#allocation8 + $0x788] sm:$0xfe] %v117
    %214 = vst [vmem:[#allocation8 + $0x790] sm:$0xfe] %v118
    %215 = vst [vmem:[#allocation8 + $0x798] sm:$0xfe] %v119
    %216 = vst [vmem:[#allocation8 + $0x7a0] sm:$0xff] %v121
    %217 = vst [vmem:[#allocation8 + $0x7a8] sm:$0xff] %v123
    %218 = vst [vmem:[#allocation8 + $0x7b0] sm:$0xff] %v125
    %219 = vst [vmem:[#allocation8 + $0x7b8] sm:$0xff] %v127
    %220 = vst [vmem:[#allocation8 + $0x7c0] sm:$0x1] %v120
    %221 = vst [vmem:[#allocation8 + $0x7c8] sm:$0x1] %v122
    %222 = vst [vmem:[#allocation8 + $0x7d0] sm:$0x1] %v124
    %223 = vst [vmem:[#allocation8 + $0x7d8] sm:$0x1] %v126
    %224 = vst [vmem:[#allocation8 + $0x8c0] sm:$0xfe] %v116
    %225 = vst [vmem:[#allocation8 + $0x8c8] sm:$0xfe] %v117
    %226 = vst [vmem:[#allocation8 + $0x8d0] sm:$0xfe] %v118
    %227 = vst [vmem:[#allocation8 + $0x8d8] sm:$0xfe] %v119
    %228 = vst [vmem:[#allocation8 + $0x8e0] sm:$0xff] %v121
    %229 = vst [vmem:[#allocation8 + $0x8e8] sm:$0xff] %v123
    %230 = vst [vmem:[#allocation8 + $0x8f0] sm:$0xff] %v125
    %231 = vst [vmem:[#allocation8 + $0x8f8] sm:$0xff] %v127
    %232 = vst [vmem:[#allocation8 + $0x900] sm:$0x1] %v120
    %233 = vst [vmem:[#allocation8 + $0x908] sm:$0x1] %v122
    %234 = vst [vmem:[#allocation8 + $0x910] sm:$0x1] %v124
    %235 = vst [vmem:[#allocation8 + $0x918] sm:$0x1] %v126
    %236 = vst [vmem:[#allocation8 + $0xa00] sm:$0xfe] %v116
    %237 = vst [vmem:[#allocation8 + $0xa08] sm:$0xfe] %v117
    %238 = vst [vmem:[#allocation8 + $0xa10] sm:$0xfe] %v118
    %239 = vst [vmem:[#allocation8 + $0xa18] sm:$0xfe] %v119
    %240 = vst [vmem:[#allocation8 + $0xa20] sm:$0xff] %v121
    %241 = vst [vmem:[#allocation8 + $0xa28] sm:$0xff] %v123
    %242 = vst [vmem:[#allocation8 + $0xa30] sm:$0xff] %v125
    %243 = vst [vmem:[#allocation8 + $0xa38] sm:$0xff] %v127
    %244 = vst [vmem:[#allocation8 + $0xa40] sm:$0x1] %v120
    %245 = vst [vmem:[#allocation8 + $0xa48] sm:$0x1] %v122
    %246 = vst [vmem:[#allocation8 + $0xa50] sm:$0x1] %v124
    %247 = vst [vmem:[#allocation8 + $0xa58] sm:$0x1] %v126
    %248 = vst [vmem:[#allocation8 + $0xb40] sm:$0xfe] %v116
    %249 = vst [vmem:[#allocation8 + $0xb48] sm:$0xfe] %v117
    %250 = vst [vmem:[#allocation8 + $0xb50] sm:$0xfe] %v118
    %251 = vst [vmem:[#allocation8 + $0xb58] sm:$0xfe] %v119
    %252 = vst [vmem:[#allocation8 + $0xb60] sm:$0xff] %v121
    %253 = vst [vmem:[#allocation8 + $0xb68] sm:$0xff] %v123
    %254 = vst [vmem:[#allocation8 + $0xb70] sm:$0xff] %v125
    %255 = vst [vmem:[#allocation8 + $0xb78] sm:$0xff] %v127
    %256 = vst [vmem:[#allocation8 + $0xb80] sm:$0x1] %v120
    %257 = vst [vmem:[#allocation8 + $0xb88] sm:$0x1] %v122
    %258 = vst [vmem:[#allocation8 + $0xb90] sm:$0x1] %v124
    %259 = vst [vmem:[#allocation8 + $0xb98] sm:$0x1] %v126
    %v260 = vld [vmem:[#allocation7] sm:$0xff]
    %v261 = vld [vmem:[#allocation7 + $0x8] sm:$0xff]
    %v262 = vld [vmem:[#allocation7 + $0x10] sm:$0xff]
    %v263 = vld [vmem:[#allocation7 + $0x18] sm:$0xff]
    %v264 = vld [vmem:[#allocation7 + $0x20] sm:$0xff]
    %v265 = vld [vmem:[#allocation7 + $0x28] sm:$0xff]
    %v266 = vld [vmem:[#allocation7 + $0x30] sm:$0xff]
    %v267 = vld [vmem:[#allocation7 + $0x38] sm:$0xff]
    %v268 = vld [vmem:[#allocation7 + $0x40] sm:$0xff]
    %v269 = vld [vmem:[#allocation7 + $0x48] sm:$0xff]
    %v270 = vld [vmem:[#allocation7 + $0x50] sm:$0xff]
    %v271 = vld [vmem:[#allocation7 + $0x58] sm:$0xff]
    %v272 = vld [vmem:[#allocation7 + $0x60] sm:$0xff]
    %v273 = vld [vmem:[#allocation7 + $0x68] sm:$0xff]
    %v274 = vld [vmem:[#allocation7 + $0x70] sm:$0xff]
    %v275 = vld [vmem:[#allocation7 + $0x78] sm:$0xff]
    %v276 = vld [vmem:[#allocation7 + $0x80] sm:$0xff]
    %v277 = vld [vmem:[#allocation7 + $0x88] sm:$0xff]
    %v278 = vld [vmem:[#allocation7 + $0x90] sm:$0xff]
    %v279 = vld [vmem:[#allocation7 + $0x98] sm:$0xff]
    %v280 = vld [vmem:[#allocation7 + $0xa0] sm:$0xff]
    %v281 = vld [vmem:[#allocation7 + $0xa8] sm:$0xff]
    %v282 = vld [vmem:[#allocation7 + $0xb0] sm:$0xff]
    %v283 = vld [vmem:[#allocation7 + $0xb8] sm:$0xff]
    %v284 = vld [vmem:[#allocation7 + $0xc0] sm:$0xff]
    %v285 = vld [vmem:[#allocation7 + $0xc8] sm:$0xff]
    %v286 = vld [vmem:[#allocation7 + $0xd0] sm:$0xff]
    %v287 = vld [vmem:[#allocation7 + $0xd8] sm:$0xff]
    %v288 = vld [vmem:[#allocation7 + $0xe0] sm:$0xf]
    %v289 = vld [vmem:[#allocation7 + $0xe8] sm:$0xf]
    %v290 = vld [vmem:[#allocation7 + $0xf0] sm:$0xf]
    %v291 = vld [vmem:[#allocation7 + $0xf8] sm:$0xf]
    %v292 = vld [vmem:[#allocation7 + $0x100] sm:$0xff]
    %v293 = vld [vmem:[#allocation7 + $0x108] sm:$0xff]
    %v294 = vld [vmem:[#allocation7 + $0x110] sm:$0xff]
    %v295 = vld [vmem:[#allocation7 + $0x118] sm:$0xff]
    %v296 = vld [vmem:[#allocation7 + $0x120] sm:$0xff]
    %v297 = vld [vmem:[#allocation7 + $0x128] sm:$0xff]
    %v298 = vld [vmem:[#allocation7 + $0x130] sm:$0xff]
    %v299 = vld [vmem:[#allocation7 + $0x138] sm:$0xff]
    %v300 = vld [vmem:[#allocation7 + $0x140] sm:$0xff]
    %v301 = vld [vmem:[#allocation7 + $0x148] sm:$0xff]
    %v302 = vld [vmem:[#allocation7 + $0x150] sm:$0xff]
    %v303 = vld [vmem:[#allocation7 + $0x158] sm:$0xff]
    %v304 = vld [vmem:[#allocation7 + $0x160] sm:$0xff]
    %v305 = vld [vmem:[#allocation7 + $0x168] sm:$0xff]
    %v306 = vld [vmem:[#allocation7 + $0x170] sm:$0xff]
    %v307 = vld [vmem:[#allocation7 + $0x178] sm:$0xff]
    %v308 = vld [vmem:[#allocation7 + $0x180] sm:$0xff]
    %v309 = vld [vmem:[#allocation7 + $0x188] sm:$0xff]
    %v310 = vld [vmem:[#allocation7 + $0x190] sm:$0xff]
    %v311 = vld [vmem:[#allocation7 + $0x198] sm:$0xff]
    %v312 = vld [vmem:[#allocation7 + $0x1a0] sm:$0xff]
    %v313 = vld [vmem:[#allocation7 + $0x1a8] sm:$0xff]
    %v314 = vld [vmem:[#allocation7 + $0x1b0] sm:$0xff]
    %v315 = vld [vmem:[#allocation7 + $0x1b8] sm:$0xff]
    %v316 = vld [vmem:[#allocation7 + $0x1c0] sm:$0xff]
    %v317 = vld [vmem:[#allocation7 + $0x1c8] sm:$0xff]
    %v318 = vld [vmem:[#allocation7 + $0x1d0] sm:$0xff]
    %v319 = vld [vmem:[#allocation7 + $0x1d8] sm:$0xff]
    %v320 = vld [vmem:[#allocation7 + $0x1e0] sm:$0xf]
    %v321 = vld [vmem:[#allocation7 + $0x1e8] sm:$0xf]
    %v322 = vld [vmem:[#allocation7 + $0x1f0] sm:$0xf]
    %v323 = vld [vmem:[#allocation7 + $0x1f8] sm:$0xf]
    %v324 = vld [vmem:[#allocation7 + $0x200] sm:$0xff]
    %v325 = vld [vmem:[#allocation7 + $0x208] sm:$0xff]
    %v326 = vld [vmem:[#allocation7 + $0x210] sm:$0xff]
    %v327 = vld [vmem:[#allocation7 + $0x218] sm:$0xff]
    %v328 = vld [vmem:[#allocation7 + $0x220] sm:$0xff]
    %v329 = vld [vmem:[#allocation7 + $0x228] sm:$0xff]
    %v330 = vld [vmem:[#allocation7 + $0x230] sm:$0xff]
    %v331 = vld [vmem:[#allocation7 + $0x238] sm:$0xff]
    %v332 = vld [vmem:[#allocation7 + $0x240] sm:$0xff]
    %v333 = vld [vmem:[#allocation7 + $0x248] sm:$0xff]
    %v334 = vld [vmem:[#allocation7 + $0x250] sm:$0xff]
    %v335 = vld [vmem:[#allocation7 + $0x258] sm:$0xff]
    %v336 = vld [vmem:[#allocation7 + $0x260] sm:$0xff]
    %v337 = vld [vmem:[#allocation7 + $0x268] sm:$0xff]
    %v338 = vld [vmem:[#allocation7 + $0x270] sm:$0xff]
    %v339 = vld [vmem:[#allocation7 + $0x278] sm:$0xff]
    %v340 = vld [vmem:[#allocation7 + $0x280] sm:$0xff]
    %v341 = vld [vmem:[#allocation7 + $0x288] sm:$0xff]
    %v342 = vld [vmem:[#allocation7 + $0x290] sm:$0xff]
    %v343 = vld [vmem:[#allocation7 + $0x298] sm:$0xff]
    %v344 = vld [vmem:[#allocation7 + $0x2a0] sm:$0xff]
    %v345 = vld [vmem:[#allocation7 + $0x2a8] sm:$0xff]
    %v346 = vld [vmem:[#allocation7 + $0x2b0] sm:$0xff]
    %v347 = vld [vmem:[#allocation7 + $0x2b8] sm:$0xff]
    %v348 = vld [vmem:[#allocation7 + $0x2c0] sm:$0xff]
    %v349 = vld [vmem:[#allocation7 + $0x2c8] sm:$0xff]
    %v350 = vld [vmem:[#allocation7 + $0x2d0] sm:$0xff]
    %v351 = vld [vmem:[#allocation7 + $0x2d8] sm:$0xff]
    %v352 = vld [vmem:[#allocation7 + $0x2e0] sm:$0xf]
    %v353 = vld [vmem:[#allocation7 + $0x2e8] sm:$0xf]
    %v354 = vld [vmem:[#allocation7 + $0x2f0] sm:$0xf]
    %v355 = vld [vmem:[#allocation7 + $0x2f8] sm:$0xf]
    %v356 = vld [vmem:[#allocation7 + $0x300] sm:$0xff]
    %v357 = vld [vmem:[#allocation7 + $0x308] sm:$0xff]
    %v358 = vld [vmem:[#allocation7 + $0x310] sm:$0xff]
    %v359 = vld [vmem:[#allocation7 + $0x318] sm:$0xff]
    %v360 = vld [vmem:[#allocation7 + $0x320] sm:$0xff]
    %v361 = vld [vmem:[#allocation7 + $0x328] sm:$0xff]
    %v362 = vld [vmem:[#allocation7 + $0x330] sm:$0xff]
    %v363 = vld [vmem:[#allocation7 + $0x338] sm:$0xff]
    %v364 = vld [vmem:[#allocation7 + $0x340] sm:$0xff]
    %v365 = vld [vmem:[#allocation7 + $0x348] sm:$0xff]
    %v366 = vld [vmem:[#allocation7 + $0x350] sm:$0xff]
    %v367 = vld [vmem:[#allocation7 + $0x358] sm:$0xff]
    %v368 = vld [vmem:[#allocation7 + $0x360] sm:$0xff]
    %v369 = vld [vmem:[#allocation7 + $0x368] sm:$0xff]
    %v370 = vld [vmem:[#allocation7 + $0x370] sm:$0xff]
    %v371 = vld [vmem:[#allocation7 + $0x378] sm:$0xff]
    %v372 = vld [vmem:[#allocation7 + $0x380] sm:$0xff]
    %v373 = vld [vmem:[#allocation7 + $0x388] sm:$0xff]
    %v374 = vld [vmem:[#allocation7 + $0x390] sm:$0xff]
    %v375 = vld [vmem:[#allocation7 + $0x398] sm:$0xff]
    %v376 = vld [vmem:[#allocation7 + $0x3a0] sm:$0xff]
    %v377 = vld [vmem:[#allocation7 + $0x3a8] sm:$0xff]
    %v378 = vld [vmem:[#allocation7 + $0x3b0] sm:$0xff]
    %v379 = vld [vmem:[#allocation7 + $0x3b8] sm:$0xff]
    %v380 = vld [vmem:[#allocation7 + $0x3c0] sm:$0xff]
    %v381 = vld [vmem:[#allocation7 + $0x3c8] sm:$0xff]
    %v382 = vld [vmem:[#allocation7 + $0x3d0] sm:$0xff]
    %v383 = vld [vmem:[#allocation7 + $0x3d8] sm:$0xff]
    %v384 = vld [vmem:[#allocation7 + $0x3e0] sm:$0xf]
    %v385 = vld [vmem:[#allocation7 + $0x3e8] sm:$0xf]
    %v386 = vld [vmem:[#allocation7 + $0x3f0] sm:$0xf]
    %v387 = vld [vmem:[#allocation7 + $0x3f8] sm:$0xf]
    %v388 = vld [vmem:[#allocation7 + $0x400] sm:$0xff]
    %v389 = vld [vmem:[#allocation7 + $0x408] sm:$0xff]
    %v390 = vld [vmem:[#allocation7 + $0x410] sm:$0xff]
    %v391 = vld [vmem:[#allocation7 + $0x418] sm:$0xff]
    %v392 = vld [vmem:[#allocation7 + $0x420] sm:$0xff]
    %v393 = vld [vmem:[#allocation7 + $0x428] sm:$0xff]
    %v394 = vld [vmem:[#allocation7 + $0x430] sm:$0xff]
    %v395 = vld [vmem:[#allocation7 + $0x438] sm:$0xff]
    %v396 = vld [vmem:[#allocation7 + $0x440] sm:$0xff]
    %v397 = vld [vmem:[#allocation7 + $0x448] sm:$0xff]
    %v398 = vld [vmem:[#allocation7 + $0x450] sm:$0xff]
    %v399 = vld [vmem:[#allocation7 + $0x458] sm:$0xff]
    %v400 = vld [vmem:[#allocation7 + $0x460] sm:$0xff]
    %v401 = vld [vmem:[#allocation7 + $0x468] sm:$0xff]
    %v402 = vld [vmem:[#allocation7 + $0x470] sm:$0xff]
    %v403 = vld [vmem:[#allocation7 + $0x478] sm:$0xff]
    %v404 = vld [vmem:[#allocation7 + $0x480] sm:$0xff]
    %v405 = vld [vmem:[#allocation7 + $0x488] sm:$0xff]
    %v406 = vld [vmem:[#allocation7 + $0x490] sm:$0xff]
    %v407 = vld [vmem:[#allocation7 + $0x498] sm:$0xff]
    %v408 = vld [vmem:[#allocation7 + $0x4a0] sm:$0xff]
    %v409 = vld [vmem:[#allocation7 + $0x4a8] sm:$0xff]
    %v410 = vld [vmem:[#allocation7 + $0x4b0] sm:$0xff]
    %v411 = vld [vmem:[#allocation7 + $0x4b8] sm:$0xff]
    %v412 = vld [vmem:[#allocation7 + $0x4c0] sm:$0xff]
    %v413 = vld [vmem:[#allocation7 + $0x4c8] sm:$0xff]
    %v414 = vld [vmem:[#allocation7 + $0x4d0] sm:$0xff]
    %v415 = vld [vmem:[#allocation7 + $0x4d8] sm:$0xff]
    %v416 = vld [vmem:[#allocation7 + $0x4e0] sm:$0xf]
    %v417 = vld [vmem:[#allocation7 + $0x4e8] sm:$0xf]
    %v418 = vld [vmem:[#allocation7 + $0x4f0] sm:$0xf]
    %v419 = vld [vmem:[#allocation7 + $0x4f8] sm:$0xf]
    %v420 = vld [vmem:[#allocation7 + $0x500] sm:$0xff]
    %v421 = vld [vmem:[#allocation7 + $0x508] sm:$0xff]
    %v422 = vld [vmem:[#allocation7 + $0x510] sm:$0xff]
    %v423 = vld [vmem:[#allocation7 + $0x518] sm:$0xff]
    %v424 = vld [vmem:[#allocation7 + $0x520] sm:$0xff]
    %v425 = vld [vmem:[#allocation7 + $0x528] sm:$0xff]
    %v426 = vld [vmem:[#allocation7 + $0x530] sm:$0xff]
    %v427 = vld [vmem:[#allocation7 + $0x538] sm:$0xff]
    %v428 = vld [vmem:[#allocation7 + $0x540] sm:$0xff]
    %v429 = vld [vmem:[#allocation7 + $0x548] sm:$0xff]
    %v430 = vld [vmem:[#allocation7 + $0x550] sm:$0xff]
    %v431 = vld [vmem:[#allocation7 + $0x558] sm:$0xff]
    %v432 = vld [vmem:[#allocation7 + $0x560] sm:$0xff]
    %v433 = vld [vmem:[#allocation7 + $0x568] sm:$0xff]
    %v434 = vld [vmem:[#allocation7 + $0x570] sm:$0xff]
    %v435 = vld [vmem:[#allocation7 + $0x578] sm:$0xff]
    %v436 = vld [vmem:[#allocation7 + $0x580] sm:$0xff]
    %v437 = vld [vmem:[#allocation7 + $0x588] sm:$0xff]
    %v438 = vld [vmem:[#allocation7 + $0x590] sm:$0xff]
    %v439 = vld [vmem:[#allocation7 + $0x598] sm:$0xff]
    %v440 = vld [vmem:[#allocation7 + $0x5a0] sm:$0xff]
    %v441 = vld [vmem:[#allocation7 + $0x5a8] sm:$0xff]
    %v442 = vld [vmem:[#allocation7 + $0x5b0] sm:$0xff]
    %v443 = vld [vmem:[#allocation7 + $0x5b8] sm:$0xff]
    %v444 = vld [vmem:[#allocation7 + $0x5c0] sm:$0xff]
    %v445 = vld [vmem:[#allocation7 + $0x5c8] sm:$0xff]
    %v446 = vld [vmem:[#allocation7 + $0x5d0] sm:$0xff]
    %v447 = vld [vmem:[#allocation7 + $0x5d8] sm:$0xff]
    %v448 = vld [vmem:[#allocation7 + $0x5e0] sm:$0xf]
    %v449 = vld [vmem:[#allocation7 + $0x5e8] sm:$0xf]
    %v450 = vld [vmem:[#allocation7 + $0x5f0] sm:$0xf]
    %v451 = vld [vmem:[#allocation7 + $0x5f8] sm:$0xf]
    %v452 = vld [vmem:[#allocation7 + $0x600] sm:$0xff]
    %v453 = vld [vmem:[#allocation7 + $0x608] sm:$0xff]
    %v454 = vld [vmem:[#allocation7 + $0x610] sm:$0xff]
    %v455 = vld [vmem:[#allocation7 + $0x618] sm:$0xff]
    %v456 = vld [vmem:[#allocation7 + $0x620] sm:$0xff]
    %v457 = vld [vmem:[#allocation7 + $0x628] sm:$0xff]
    %v458 = vld [vmem:[#allocation7 + $0x630] sm:$0xff]
    %v459 = vld [vmem:[#allocation7 + $0x638] sm:$0xff]
    %v460 = vld [vmem:[#allocation7 + $0x640] sm:$0xff]
    %v461 = vld [vmem:[#allocation7 + $0x648] sm:$0xff]
    %v462 = vld [vmem:[#allocation7 + $0x650] sm:$0xff]
    %v463 = vld [vmem:[#allocation7 + $0x658] sm:$0xff]
    %v464 = vld [vmem:[#allocation7 + $0x660] sm:$0xff]
    %v465 = vld [vmem:[#allocation7 + $0x668] sm:$0xff]
    %v466 = vld [vmem:[#allocation7 + $0x670] sm:$0xff]
    %v467 = vld [vmem:[#allocation7 + $0x678] sm:$0xff]
    %v468 = vld [vmem:[#allocation7 + $0x680] sm:$0xff]
    %v469 = vld [vmem:[#allocation7 + $0x688] sm:$0xff]
    %v470 = vld [vmem:[#allocation7 + $0x690] sm:$0xff]
    %v471 = vld [vmem:[#allocation7 + $0x698] sm:$0xff]
    %v472 = vld [vmem:[#allocation7 + $0x6a0] sm:$0xff]
    %v473 = vld [vmem:[#allocation7 + $0x6a8] sm:$0xff]
    %v474 = vld [vmem:[#allocation7 + $0x6b0] sm:$0xff]
    %v475 = vld [vmem:[#allocation7 + $0x6b8] sm:$0xff]
    %v476 = vld [vmem:[#allocation7 + $0x6c0] sm:$0xff]
    %v477 = vld [vmem:[#allocation7 + $0x6c8] sm:$0xff]
    %v478 = vld [vmem:[#allocation7 + $0x6d0] sm:$0xff]
    %v479 = vld [vmem:[#allocation7 + $0x6d8] sm:$0xff]
    %v480 = vld [vmem:[#allocation7 + $0x6e0] sm:$0xf]
    %v481 = vld [vmem:[#allocation7 + $0x6e8] sm:$0xf]
    %v482 = vld [vmem:[#allocation7 + $0x6f0] sm:$0xf]
    %v483 = vld [vmem:[#allocation7 + $0x6f8] sm:$0xf]
    %v484 = vld [vmem:[#allocation7 + $0x700] sm:$0xff]
    %v485 = vld [vmem:[#allocation7 + $0x708] sm:$0xff]
    %v486 = vld [vmem:[#allocation7 + $0x710] sm:$0xff]
    %v487 = vld [vmem:[#allocation7 + $0x718] sm:$0xff]
    %v488 = vld [vmem:[#allocation7 + $0x720] sm:$0xff]
    %v489 = vld [vmem:[#allocation7 + $0x728] sm:$0xff]
    %v490 = vld [vmem:[#allocation7 + $0x730] sm:$0xff]
    %v491 = vld [vmem:[#allocation7 + $0x738] sm:$0xff]
    %v492 = vld [vmem:[#allocation7 + $0x740] sm:$0xff]
    %v493 = vld [vmem:[#allocation7 + $0x748] sm:$0xff]
    %v494 = vld [vmem:[#allocation7 + $0x750] sm:$0xff]
    %v495 = vld [vmem:[#allocation7 + $0x758] sm:$0xff]
    %v496 = vld [vmem:[#allocation7 + $0x760] sm:$0xff]
    %v497 = vld [vmem:[#allocation7 + $0x768] sm:$0xff]
    %v498 = vld [vmem:[#allocation7 + $0x770] sm:$0xff]
    %v499 = vld [vmem:[#allocation7 + $0x778] sm:$0xff]
    %v500 = vld [vmem:[#allocation7 + $0x780] sm:$0xff]
    %v501 = vld [vmem:[#allocation7 + $0x788] sm:$0xff]
    %v502 = vld [vmem:[#allocation7 + $0x790] sm:$0xff]
    %v503 = vld [vmem:[#allocation7 + $0x798] sm:$0xff]
    %v504 = vld [vmem:[#allocation7 + $0x7a0] sm:$0xff]
    %v505 = vld [vmem:[#allocation7 + $0x7a8] sm:$0xff]
    %v506 = vld [vmem:[#allocation7 + $0x7b0] sm:$0xff]
    %v507 = vld [vmem:[#allocation7 + $0x7b8] sm:$0xff]
    %v508 = vld [vmem:[#allocation7 + $0x7c0] sm:$0xff]
    %v509 = vld [vmem:[#allocation7 + $0x7c8] sm:$0xff]
    %v510 = vld [vmem:[#allocation7 + $0x7d0] sm:$0xff]
    %v511 = vld [vmem:[#allocation7 + $0x7d8] sm:$0xff]
    %v512 = vld [vmem:[#allocation7 + $0x7e0] sm:$0xf]
    %v513 = vld [vmem:[#allocation7 + $0x7e8] sm:$0xf]
    %v514 = vld [vmem:[#allocation7 + $0x7f0] sm:$0xf]
    %v515 = vld [vmem:[#allocation7 + $0x7f8] sm:$0xf]
    %v516 = vld [vmem:[#allocation7 + $0x800] sm:$0xff]
    %v517 = vld [vmem:[#allocation7 + $0x808] sm:$0xff]
    %v518 = vld [vmem:[#allocation7 + $0x810] sm:$0xff]
    %v519 = vld [vmem:[#allocation7 + $0x818] sm:$0xff]
    %v520 = vld [vmem:[#allocation7 + $0x820] sm:$0xff]
    %v521 = vld [vmem:[#allocation7 + $0x828] sm:$0xff]
    %v522 = vld [vmem:[#allocation7 + $0x830] sm:$0xff]
    %v523 = vld [vmem:[#allocation7 + $0x838] sm:$0xff]
    %v524 = vld [vmem:[#allocation7 + $0x840] sm:$0xff]
    %v525 = vld [vmem:[#allocation7 + $0x848] sm:$0xff]
    %v526 = vld [vmem:[#allocation7 + $0x850] sm:$0xff]
    %v527 = vld [vmem:[#allocation7 + $0x858] sm:$0xff]
    %v528 = vld [vmem:[#allocation7 + $0x860] sm:$0xff]
    %v529 = vld [vmem:[#allocation7 + $0x868] sm:$0xff]
    %v530 = vld [vmem:[#allocation7 + $0x870] sm:$0xff]
    %v531 = vld [vmem:[#allocation7 + $0x878] sm:$0xff]
    %v532 = vld [vmem:[#allocation7 + $0x880] sm:$0xff]
    %v533 = vld [vmem:[#allocation7 + $0x888] sm:$0xff]
    %v534 = vld [vmem:[#allocation7 + $0x890] sm:$0xff]
    %v535 = vld [vmem:[#allocation7 + $0x898] sm:$0xff]
    %v536 = vld [vmem:[#allocation7 + $0x8a0] sm:$0xff]
    %v537 = vld [vmem:[#allocation7 + $0x8a8] sm:$0xff]
    %v538 = vld [vmem:[#allocation7 + $0x8b0] sm:$0xff]
    %v539 = vld [vmem:[#allocation7 + $0x8b8] sm:$0xff]
    %v540 = vld [vmem:[#allocation7 + $0x8c0] sm:$0xff]
    %v541 = vld [vmem:[#allocation7 + $0x8c8] sm:$0xff]
    %v542 = vld [vmem:[#allocation7 + $0x8d0] sm:$0xff]
    %v543 = vld [vmem:[#allocation7 + $0x8d8] sm:$0xff]
    %v544 = vld [vmem:[#allocation7 + $0x8e0] sm:$0xf]
    %v545 = vld [vmem:[#allocation7 + $0x8e8] sm:$0xf]
    %v546 = vld [vmem:[#allocation7 + $0x8f0] sm:$0xf]
    %v547 = vld [vmem:[#allocation7 + $0x8f8] sm:$0xf]
    %v548 = vld [vmem:[#allocation7 + $0x900] sm:$0xff]
    %v549 = vld [vmem:[#allocation7 + $0x908] sm:$0xff]
    %v550 = vld [vmem:[#allocation7 + $0x910] sm:$0xff]
    %v551 = vld [vmem:[#allocation7 + $0x918] sm:$0xff]
    %v552 = vld [vmem:[#allocation7 + $0x920] sm:$0xff]
    %v553 = vld [vmem:[#allocation7 + $0x928] sm:$0xff]
    %v554 = vld [vmem:[#allocation7 + $0x930] sm:$0xff]
    %v555 = vld [vmem:[#allocation7 + $0x938] sm:$0xff]
    %v556 = vld [vmem:[#allocation7 + $0x940] sm:$0xff]
    %v557 = vld [vmem:[#allocation7 + $0x948] sm:$0xff]
    %v558 = vld [vmem:[#allocation7 + $0x950] sm:$0xff]
    %v559 = vld [vmem:[#allocation7 + $0x958] sm:$0xff]
    %v560 = vld [vmem:[#allocation7 + $0x960] sm:$0xff]
    %v561 = vld [vmem:[#allocation7 + $0x968] sm:$0xff]
    %v562 = vld [vmem:[#allocation7 + $0x970] sm:$0xff]
    %v563 = vld [vmem:[#allocation7 + $0x978] sm:$0xff]
    %v564 = vld [vmem:[#allocation7 + $0x980] sm:$0xff]
    %v565 = vld [vmem:[#allocation7 + $0x988] sm:$0xff]
    %v566 = vld [vmem:[#allocation7 + $0x990] sm:$0xff]
    %v567 = vld [vmem:[#allocation7 + $0x998] sm:$0xff]
    %v568 = vld [vmem:[#allocation7 + $0x9a0] sm:$0xff]
    %v569 = vld [vmem:[#allocation7 + $0x9a8] sm:$0xff]
    %v570 = vld [vmem:[#allocation7 + $0x9b0] sm:$0xff]
    %v571 = vld [vmem:[#allocation7 + $0x9b8] sm:$0xff]
    %v572 = vld [vmem:[#allocation7 + $0x9c0] sm:$0xff]
    %v573 = vld [vmem:[#allocation7 + $0x9c8] sm:$0xff]
    %v574 = vld [vmem:[#allocation7 + $0x9d0] sm:$0xff]
    %v575 = vld [vmem:[#allocation7 + $0x9d8] sm:$0xff]
    %v576 = vld [vmem:[#allocation7 + $0x9e0] sm:$0xf]
    %v577 = vld [vmem:[#allocation7 + $0x9e8] sm:$0xf]
    %v578 = vld [vmem:[#allocation7 + $0x9f0] sm:$0xf]
    %v579 = vld [vmem:[#allocation7 + $0x9f8] sm:$0xf]
    %v900 = vrot.slane %v260, 7
    %v901 = vrot.slane %v261, 7
    %v902 = vrot.slane %v262, 7
    %v903 = vrot.slane %v263, 7
    %v904 = vrot.slane %v264, 7
    %v905 = vsel %vm115, %v900, %v904
    %v906 = vrot.slane %v265, 7
    %v907 = vsel %vm115, %v901, %v906
    %v908 = vrot.slane %v266, 7
    %v909 = vsel %vm115, %v902, %v908
    %v910 = vrot.slane %v267, 7
    %v911 = vsel %vm115, %v903, %v910
    %v912 = vrot.slane %v268, 7
    %v913 = vsel %vm115, %v904, %v912
    %v914 = vrot.slane %v269, 7
    %v915 = vsel %vm115, %v906, %v914
    %v916 = vrot.slane %v270, 7
    %v917 = vsel %vm115, %v908, %v916
    %v918 = vrot.slane %v271, 7
    %v919 = vsel %vm115, %v910, %v918
    %v920 = vrot.slane %v272, 7
    %v921 = vsel %vm115, %v912, %v920
    %v922 = vrot.slane %v273, 7
    %v923 = vsel %vm115, %v914, %v922
    %v924 = vrot.slane %v274, 7
    %v925 = vsel %vm115, %v916, %v924
    %v926 = vrot.slane %v275, 7
    %v927 = vsel %vm115, %v918, %v926
    %v928 = vrot.slane %v276, 7
    %v929 = vsel %vm115, %v920, %v928
    %v930 = vrot.slane %v277, 7
    %v931 = vsel %vm115, %v922, %v930
    %v932 = vrot.slane %v278, 7
    %v933 = vsel %vm115, %v924, %v932
    %v934 = vrot.slane %v279, 7
    %v935 = vsel %vm115, %v926, %v934
    %v936 = vrot.slane %v280, 7
    %v937 = vsel %vm115, %v928, %v936
    %v938 = vrot.slane %v281, 7
    %v939 = vsel %vm115, %v930, %v938
    %v940 = vrot.slane %v282, 7
    %v941 = vsel %vm115, %v932, %v940
    %v942 = vrot.slane %v283, 7
    %v943 = vsel %vm115, %v934, %v942
    %v944 = vrot.slane %v284, 7
    %v945 = vsel %vm115, %v936, %v944
    %v946 = vrot.slane %v285, 7
    %v947 = vsel %vm115, %v938, %v946
    %v948 = vrot.slane %v286, 7
    %v949 = vsel %vm115, %v940, %v948
    %v950 = vrot.slane %v287, 7
    %v951 = vsel %vm115, %v942, %v950
    %v952 = vrot.slane %v288, 7
    %v953 = vsel %vm115, %v944, %v952
    %v954 = vrot.slane %v289, 7
    %v955 = vsel %vm115, %v946, %v954
    %v956 = vrot.slane %v290, 7
    %v957 = vsel %vm115, %v948, %v956
    %v958 = vrot.slane %v291, 7
    %v959 = vsel %vm115, %v950, %v958
    %v960 = vrot.slane %v292, 7
    %v961 = vrot.slane %v293, 7
    %v962 = vrot.slane %v294, 7
    %v963 = vrot.slane %v295, 7
    %v964 = vrot.slane %v296, 7
    %v965 = vsel %vm115, %v960, %v964
    %v966 = vrot.slane %v297, 7
    %v967 = vsel %vm115, %v961, %v966
    %v968 = vrot.slane %v298, 7
    %v969 = vsel %vm115, %v962, %v968
    %v970 = vrot.slane %v299, 7
    %v971 = vsel %vm115, %v963, %v970
    %v972 = vrot.slane %v300, 7
    %v973 = vsel %vm115, %v964, %v972
    %v974 = vrot.slane %v301, 7
    %v975 = vsel %vm115, %v966, %v974
    %v976 = vrot.slane %v302, 7
    %v977 = vsel %vm115, %v968, %v976
    %v978 = vrot.slane %v303, 7
    %v979 = vsel %vm115, %v970, %v978
    %v980 = vrot.slane %v304, 7
    %v981 = vsel %vm115, %v972, %v980
    %v982 = vrot.slane %v305, 7
    %v983 = vsel %vm115, %v974, %v982
    %v984 = vrot.slane %v306, 7
    %v985 = vsel %vm115, %v976, %v984
    %v986 = vrot.slane %v307, 7
    %v987 = vsel %vm115, %v978, %v986
    %v988 = vrot.slane %v308, 7
    %v989 = vsel %vm115, %v980, %v988
    %v990 = vrot.slane %v309, 7
    %v991 = vsel %vm115, %v982, %v990
    %v992 = vrot.slane %v310, 7
    %v993 = vsel %vm115, %v984, %v992
    %v994 = vrot.slane %v311, 7
    %v995 = vsel %vm115, %v986, %v994
    %v996 = vrot.slane %v312, 7
    %v997 = vsel %vm115, %v988, %v996
    %v998 = vrot.slane %v313, 7
    %v999 = vsel %vm115, %v990, %v998
    %v1000 = vrot.slane %v314, 7
    %v1001 = vsel %vm115, %v992, %v1000
    %v1002 = vrot.slane %v315, 7
    %v1003 = vsel %vm115, %v994, %v1002
    %v1004 = vrot.slane %v316, 7
    %v1005 = vsel %vm115, %v996, %v1004
    %v1006 = vrot.slane %v317, 7
    %v1007 = vsel %vm115, %v998, %v1006
    %v1008 = vrot.slane %v318, 7
    %v1009 = vsel %vm115, %v1000, %v1008
    %v1010 = vrot.slane %v319, 7
    %v1011 = vsel %vm115, %v1002, %v1010
    %v1012 = vrot.slane %v320, 7
    %v1013 = vsel %vm115, %v1004, %v1012
    %v1014 = vrot.slane %v321, 7
    %v1015 = vsel %vm115, %v1006, %v1014
    %v1016 = vrot.slane %v322, 7
    %v1017 = vsel %vm115, %v1008, %v1016
    %v1018 = vrot.slane %v323, 7
    %v1019 = vsel %vm115, %v1010, %v1018
    %v1020 = vrot.slane %v324, 7
    %v1021 = vrot.slane %v325, 7
    %v1022 = vrot.slane %v326, 7
    %v1023 = vrot.slane %v327, 7
    %v1024 = vrot.slane %v328, 7
    %v1025 = vsel %vm115, %v1020, %v1024
    %v1026 = vrot.slane %v329, 7
    %v1027 = vsel %vm115, %v1021, %v1026
    %v1028 = vrot.slane %v330, 7
    %v1029 = vsel %vm115, %v1022, %v1028
    %v1030 = vrot.slane %v331, 7
    %v1031 = vsel %vm115, %v1023, %v1030
    %v1032 = vrot.slane %v332, 7
    %v1033 = vsel %vm115, %v1024, %v1032
    %v1034 = vrot.slane %v333, 7
    %v1035 = vsel %vm115, %v1026, %v1034
    %v1036 = vrot.slane %v334, 7
    %v1037 = vsel %vm115, %v1028, %v1036
    %v1038 = vrot.slane %v335, 7
    %v1039 = vsel %vm115, %v1030, %v1038
    %v1040 = vrot.slane %v336, 7
    %v1041 = vsel %vm115, %v1032, %v1040
    %v1042 = vrot.slane %v337, 7
    %v1043 = vsel %vm115, %v1034, %v1042
    %v1044 = vrot.slane %v338, 7
    %v1045 = vsel %vm115, %v1036, %v1044
    %v1046 = vrot.slane %v339, 7
    %v1047 = vsel %vm115, %v1038, %v1046
    %v1048 = vrot.slane %v340, 7
    %v1049 = vsel %vm115, %v1040, %v1048
    %v1050 = vrot.slane %v341, 7
    %v1051 = vsel %vm115, %v1042, %v1050
    %v1052 = vrot.slane %v342, 7
    %v1053 = vsel %vm115, %v1044, %v1052
    %v1054 = vrot.slane %v343, 7
    %v1055 = vsel %vm115, %v1046, %v1054
    %v1056 = vrot.slane %v344, 7
    %v1057 = vsel %vm115, %v1048, %v1056
    %v1058 = vrot.slane %v345, 7
    %v1059 = vsel %vm115, %v1050, %v1058
    %v1060 = vrot.slane %v346, 7
    %v1061 = vsel %vm115, %v1052, %v1060
    %v1062 = vrot.slane %v347, 7
    %v1063 = vsel %vm115, %v1054, %v1062
    %v1064 = vrot.slane %v348, 7
    %v1065 = vsel %vm115, %v1056, %v1064
    %v1066 = vrot.slane %v349, 7
    %v1067 = vsel %vm115, %v1058, %v1066
    %v1068 = vrot.slane %v350, 7
    %v1069 = vsel %vm115, %v1060, %v1068
    %v1070 = vrot.slane %v351, 7
    %v1071 = vsel %vm115, %v1062, %v1070
    %v1072 = vrot.slane %v352, 7
    %v1073 = vsel %vm115, %v1064, %v1072
    %v1074 = vrot.slane %v353, 7
    %v1075 = vsel %vm115, %v1066, %v1074
    %v1076 = vrot.slane %v354, 7
    %v1077 = vsel %vm115, %v1068, %v1076
    %v1078 = vrot.slane %v355, 7
    %v1079 = vsel %vm115, %v1070, %v1078
    %v1080 = vrot.slane %v356, 7
    %v1081 = vrot.slane %v357, 7
    %v1082 = vrot.slane %v358, 7
    %v1083 = vrot.slane %v359, 7
    %v1084 = vrot.slane %v360, 7
    %v1085 = vsel %vm115, %v1080, %v1084
    %v1086 = vrot.slane %v361, 7
    %v1087 = vsel %vm115, %v1081, %v1086
    %v1088 = vrot.slane %v362, 7
    %v1089 = vsel %vm115, %v1082, %v1088
    %v1090 = vrot.slane %v363, 7
    %v1091 = vsel %vm115, %v1083, %v1090
    %v1092 = vrot.slane %v364, 7
    %v1093 = vsel %vm115, %v1084, %v1092
    %v1094 = vrot.slane %v365, 7
    %v1095 = vsel %vm115, %v1086, %v1094
    %v1096 = vrot.slane %v366, 7
    %v1097 = vsel %vm115, %v1088, %v1096
    %v1098 = vrot.slane %v367, 7
    %v1099 = vsel %vm115, %v1090, %v1098
    %v1100 = vrot.slane %v368, 7
    %v1101 = vsel %vm115, %v1092, %v1100
    %v1102 = vrot.slane %v369, 7
    %v1103 = vsel %vm115, %v1094, %v1102
    %v1104 = vrot.slane %v370, 7
    %v1105 = vsel %vm115, %v1096, %v1104
    %v1106 = vrot.slane %v371, 7
    %v1107 = vsel %vm115, %v1098, %v1106
    %v1108 = vrot.slane %v372, 7
    %v1109 = vsel %vm115, %v1100, %v1108
    %v1110 = vrot.slane %v373, 7
    %v1111 = vsel %vm115, %v1102, %v1110
    %v1112 = vrot.slane %v374, 7
    %v1113 = vsel %vm115, %v1104, %v1112
    %v1114 = vrot.slane %v375, 7
    %v1115 = vsel %vm115, %v1106, %v1114
    %v1116 = vrot.slane %v376, 7
    %v1117 = vsel %vm115, %v1108, %v1116
    %v1118 = vrot.slane %v377, 7
    %v1119 = vsel %vm115, %v1110, %v1118
    %v1120 = vrot.slane %v378, 7
    %v1121 = vsel %vm115, %v1112, %v1120
    %v1122 = vrot.slane %v379, 7
    %v1123 = vsel %vm115, %v1114, %v1122
    %v1124 = vrot.slane %v380, 7
    %v1125 = vsel %vm115, %v1116, %v1124
    %v1126 = vrot.slane %v381, 7
    %v1127 = vsel %vm115, %v1118, %v1126
    %v1128 = vrot.slane %v382, 7
    %v1129 = vsel %vm115, %v1120, %v1128
    %v1130 = vrot.slane %v383, 7
    %v1131 = vsel %vm115, %v1122, %v1130
    %v1132 = vrot.slane %v384, 7
    %v1133 = vsel %vm115, %v1124, %v1132
    %v1134 = vrot.slane %v385, 7
    %v1135 = vsel %vm115, %v1126, %v1134
    %v1136 = vrot.slane %v386, 7
    %v1137 = vsel %vm115, %v1128, %v1136
    %v1138 = vrot.slane %v387, 7
    %v1139 = vsel %vm115, %v1130, %v1138
    %v1140 = vrot.slane %v388, 7
    %v1141 = vrot.slane %v389, 7
    %v1142 = vrot.slane %v390, 7
    %v1143 = vrot.slane %v391, 7
    %v1144 = vrot.slane %v392, 7
    %v1145 = vsel %vm115, %v1140, %v1144
    %v1146 = vrot.slane %v393, 7
    %v1147 = vsel %vm115, %v1141, %v1146
    %v1148 = vrot.slane %v394, 7
    %v1149 = vsel %vm115, %v1142, %v1148
    %v1150 = vrot.slane %v395, 7
    %v1151 = vsel %vm115, %v1143, %v1150
    %v1152 = vrot.slane %v396, 7
    %v1153 = vsel %vm115, %v1144, %v1152
    %v1154 = vrot.slane %v397, 7
    %v1155 = vsel %vm115, %v1146, %v1154
    %v1156 = vrot.slane %v398, 7
    %v1157 = vsel %vm115, %v1148, %v1156
    %v1158 = vrot.slane %v399, 7
    %v1159 = vsel %vm115, %v1150, %v1158
    %v1160 = vrot.slane %v400, 7
    %v1161 = vsel %vm115, %v1152, %v1160
    %v1162 = vrot.slane %v401, 7
    %v1163 = vsel %vm115, %v1154, %v1162
    %v1164 = vrot.slane %v402, 7
    %v1165 = vsel %vm115, %v1156, %v1164
    %v1166 = vrot.slane %v403, 7
    %v1167 = vsel %vm115, %v1158, %v1166
    %v1168 = vrot.slane %v404, 7
    %v1169 = vsel %vm115, %v1160, %v1168
    %v1170 = vrot.slane %v405, 7
    %v1171 = vsel %vm115, %v1162, %v1170
    %v1172 = vrot.slane %v406, 7
    %v1173 = vsel %vm115, %v1164, %v1172
    %v1174 = vrot.slane %v407, 7
    %v1175 = vsel %vm115, %v1166, %v1174
    %v1176 = vrot.slane %v408, 7
    %v1177 = vsel %vm115, %v1168, %v1176
    %v1178 = vrot.slane %v409, 7
    %v1179 = vsel %vm115, %v1170, %v1178
    %v1180 = vrot.slane %v410, 7
    %v1181 = vsel %vm115, %v1172, %v1180
    %v1182 = vrot.slane %v411, 7
    %v1183 = vsel %vm115, %v1174, %v1182
    %v1184 = vrot.slane %v412, 7
    %v1185 = vsel %vm115, %v1176, %v1184
    %v1186 = vrot.slane %v413, 7
    %v1187 = vsel %vm115, %v1178, %v1186
    %v1188 = vrot.slane %v414, 7
    %v1189 = vsel %vm115, %v1180, %v1188
    %v1190 = vrot.slane %v415, 7
    %v1191 = vsel %vm115, %v1182, %v1190
    %v1192 = vrot.slane %v416, 7
    %v1193 = vsel %vm115, %v1184, %v1192
    %v1194 = vrot.slane %v417, 7
    %v1195 = vsel %vm115, %v1186, %v1194
    %v1196 = vrot.slane %v418, 7
    %v1197 = vsel %vm115, %v1188, %v1196
    %v1198 = vrot.slane %v419, 7
    %v1199 = vsel %vm115, %v1190, %v1198
    %v1200 = vrot.slane %v420, 7
    %v1201 = vrot.slane %v421, 7
    %v1202 = vrot.slane %v422, 7
    %v1203 = vrot.slane %v423, 7
    %v1204 = vrot.slane %v424, 7
    %v1205 = vsel %vm115, %v1200, %v1204
    %v1206 = vrot.slane %v425, 7
    %v1207 = vsel %vm115, %v1201, %v1206
    %v1208 = vrot.slane %v426, 7
    %v1209 = vsel %vm115, %v1202, %v1208
    %v1210 = vrot.slane %v427, 7
    %v1211 = vsel %vm115, %v1203, %v1210
    %v1212 = vrot.slane %v428, 7
    %v1213 = vsel %vm115, %v1204, %v1212
    %v1214 = vrot.slane %v429, 7
    %v1215 = vsel %vm115, %v1206, %v1214
    %v1216 = vrot.slane %v430, 7
    %v1217 = vsel %vm115, %v1208, %v1216
    %v1218 = vrot.slane %v431, 7
    %v1219 = vsel %vm115, %v1210, %v1218
    %v1220 = vrot.slane %v432, 7
    %v1221 = vsel %vm115, %v1212, %v1220
    %v1222 = vrot.slane %v433, 7
    %v1223 = vsel %vm115, %v1214, %v1222
    %v1224 = vrot.slane %v434, 7
    %v1225 = vsel %vm115, %v1216, %v1224
    %v1226 = vrot.slane %v435, 7
    %v1227 = vsel %vm115, %v1218, %v1226
    %v1228 = vrot.slane %v436, 7
    %v1229 = vsel %vm115, %v1220, %v1228
    %v1230 = vrot.slane %v437, 7
    %v1231 = vsel %vm115, %v1222, %v1230
    %v1232 = vrot.slane %v438, 7
    %v1233 = vsel %vm115, %v1224, %v1232
    %v1234 = vrot.slane %v439, 7
    %v1235 = vsel %vm115, %v1226, %v1234
    %v1236 = vrot.slane %v440, 7
    %v1237 = vsel %vm115, %v1228, %v1236
    %v1238 = vrot.slane %v441, 7
    %v1239 = vsel %vm115, %v1230, %v1238
    %v1240 = vrot.slane %v442, 7
    %v1241 = vsel %vm115, %v1232, %v1240
    %v1242 = vrot.slane %v443, 7
    %v1243 = vsel %vm115, %v1234, %v1242
    %v1244 = vrot.slane %v444, 7
    %v1245 = vsel %vm115, %v1236, %v1244
    %v1246 = vrot.slane %v445, 7
    %v1247 = vsel %vm115, %v1238, %v1246
    %v1248 = vrot.slane %v446, 7
    %v1249 = vsel %vm115, %v1240, %v1248
    %v1250 = vrot.slane %v447, 7
    %v1251 = vsel %vm115, %v1242, %v1250
    %v1252 = vrot.slane %v448, 7
    %v1253 = vsel %vm115, %v1244, %v1252
    %v1254 = vrot.slane %v449, 7
    %v1255 = vsel %vm115, %v1246, %v1254
    %v1256 = vrot.slane %v450, 7
    %v1257 = vsel %vm115, %v1248, %v1256
    %v1258 = vrot.slane %v451, 7
    %v1259 = vsel %vm115, %v1250, %v1258
    %v1260 = vrot.slane %v452, 7
    %v1261 = vrot.slane %v453, 7
    %v1262 = vrot.slane %v454, 7
    %v1263 = vrot.slane %v455, 7
    %v1264 = vrot.slane %v456, 7
    %v1265 = vsel %vm115, %v1260, %v1264
    %v1266 = vrot.slane %v457, 7
    %v1267 = vsel %vm115, %v1261, %v1266
    %v1268 = vrot.slane %v458, 7
    %v1269 = vsel %vm115, %v1262, %v1268
    %v1270 = vrot.slane %v459, 7
    %v1271 = vsel %vm115, %v1263, %v1270
    %v1272 = vrot.slane %v460, 7
    %v1273 = vsel %vm115, %v1264, %v1272
    %v1274 = vrot.slane %v461, 7
    %v1275 = vsel %vm115, %v1266, %v1274
    %v1276 = vrot.slane %v462, 7
    %v1277 = vsel %vm115, %v1268, %v1276
    %v1278 = vrot.slane %v463, 7
    %v1279 = vsel %vm115, %v1270, %v1278
    %v1280 = vrot.slane %v464, 7
    %v1281 = vsel %vm115, %v1272, %v1280
    %v1282 = vrot.slane %v465, 7
    %v1283 = vsel %vm115, %v1274, %v1282
    %v1284 = vrot.slane %v466, 7
    %v1285 = vsel %vm115, %v1276, %v1284
    %v1286 = vrot.slane %v467, 7
    %v1287 = vsel %vm115, %v1278, %v1286
    %v1288 = vrot.slane %v468, 7
    %v1289 = vsel %vm115, %v1280, %v1288
    %v1290 = vrot.slane %v469, 7
    %v1291 = vsel %vm115, %v1282, %v1290
    %v1292 = vrot.slane %v470, 7
    %v1293 = vsel %vm115, %v1284, %v1292
    %v1294 = vrot.slane %v471, 7
    %v1295 = vsel %vm115, %v1286, %v1294
    %v1296 = vrot.slane %v472, 7
    %v1297 = vsel %vm115, %v1288, %v1296
    %v1298 = vrot.slane %v473, 7
    %v1299 = vsel %vm115, %v1290, %v1298
    %v1300 = vrot.slane %v474, 7
    %v1301 = vsel %vm115, %v1292, %v1300
    %v1302 = vrot.slane %v475, 7
    %v1303 = vsel %vm115, %v1294, %v1302
    %v1304 = vrot.slane %v476, 7
    %v1305 = vsel %vm115, %v1296, %v1304
    %v1306 = vrot.slane %v477, 7
    %v1307 = vsel %vm115, %v1298, %v1306
    %v1308 = vrot.slane %v478, 7
    %v1309 = vsel %vm115, %v1300, %v1308
    %v1310 = vrot.slane %v479, 7
    %v1311 = vsel %vm115, %v1302, %v1310
    %v1312 = vrot.slane %v480, 7
    %v1313 = vsel %vm115, %v1304, %v1312
    %v1314 = vrot.slane %v481, 7
    %v1315 = vsel %vm115, %v1306, %v1314
    %v1316 = vrot.slane %v482, 7
    %v1317 = vsel %vm115, %v1308, %v1316
    %v1318 = vrot.slane %v483, 7
    %v1319 = vsel %vm115, %v1310, %v1318
    %v1320 = vrot.slane %v484, 7
    %v1321 = vrot.slane %v485, 7
    %v1322 = vrot.slane %v486, 7
    %v1323 = vrot.slane %v487, 7
    %v1324 = vrot.slane %v488, 7
    %v1325 = vsel %vm115, %v1320, %v1324
    %v1326 = vrot.slane %v489, 7
    %v1327 = vsel %vm115, %v1321, %v1326
    %v1328 = vrot.slane %v490, 7
    %v1329 = vsel %vm115, %v1322, %v1328
    %v1330 = vrot.slane %v491, 7
    %v1331 = vsel %vm115, %v1323, %v1330
    %v1332 = vrot.slane %v492, 7
    %v1333 = vsel %vm115, %v1324, %v1332
    %v1334 = vrot.slane %v493, 7
    %v1335 = vsel %vm115, %v1326, %v1334
    %v1336 = vrot.slane %v494, 7
    %v1337 = vsel %vm115, %v1328, %v1336
    %v1338 = vrot.slane %v495, 7
    %v1339 = vsel %vm115, %v1330, %v1338
    %v1340 = vrot.slane %v496, 7
    %v1341 = vsel %vm115, %v1332, %v1340
    %v1342 = vrot.slane %v497, 7
    %v1343 = vsel %vm115, %v1334, %v1342
    %v1344 = vrot.slane %v498, 7
    %v1345 = vsel %vm115, %v1336, %v1344
    %v1346 = vrot.slane %v499, 7
    %v1347 = vsel %vm115, %v1338, %v1346
    %v1348 = vrot.slane %v500, 7
    %v1349 = vsel %vm115, %v1340, %v1348
    %v1350 = vrot.slane %v501, 7
    %v1351 = vsel %vm115, %v1342, %v1350
    %v1352 = vrot.slane %v502, 7
    %v1353 = vsel %vm115, %v1344, %v1352
    %v1354 = vrot.slane %v503, 7
    %v1355 = vsel %vm115, %v1346, %v1354
    %v1356 = vrot.slane %v504, 7
    %v1357 = vsel %vm115, %v1348, %v1356
    %v1358 = vrot.slane %v505, 7
    %v1359 = vsel %vm115, %v1350, %v1358
    %v1360 = vrot.slane %v506, 7
    %v1361 = vsel %vm115, %v1352, %v1360
    %v1362 = vrot.slane %v507, 7
    %v1363 = vsel %vm115, %v1354, %v1362
    %v1364 = vrot.slane %v508, 7
    %v1365 = vsel %vm115, %v1356, %v1364
    %v1366 = vrot.slane %v509, 7
    %v1367 = vsel %vm115, %v1358, %v1366
    %v1368 = vrot.slane %v510, 7
    %v1369 = vsel %vm115, %v1360, %v1368
    %v1370 = vrot.slane %v511, 7
    %v1371 = vsel %vm115, %v1362, %v1370
    %v1372 = vrot.slane %v512, 7
    %v1373 = vsel %vm115, %v1364, %v1372
    %v1374 = vrot.slane %v513, 7
    %v1375 = vsel %vm115, %v1366, %v1374
    %v1376 = vrot.slane %v514, 7
    %v1377 = vsel %vm115, %v1368, %v1376
    %v1378 = vrot.slane %v515, 7
    %v1379 = vsel %vm115, %v1370, %v1378
    %v1380 = vrot.slane %v516, 7
    %v1381 = vrot.slane %v517, 7
    %v1382 = vrot.slane %v518, 7
    %v1383 = vrot.slane %v519, 7
    %v1384 = vrot.slane %v520, 7
    %v1385 = vsel %vm115, %v1380, %v1384
    %v1386 = vrot.slane %v521, 7
    %v1387 = vsel %vm115, %v1381, %v1386
    %v1388 = vrot.slane %v522, 7
    %v1389 = vsel %vm115, %v1382, %v1388
    %v1390 = vrot.slane %v523, 7
    %v1391 = vsel %vm115, %v1383, %v1390
    %v1392 = vrot.slane %v524, 7
    %v1393 = vsel %vm115, %v1384, %v1392
    %v1394 = vrot.slane %v525, 7
    %v1395 = vsel %vm115, %v1386, %v1394
    %v1396 = vrot.slane %v526, 7
    %v1397 = vsel %vm115, %v1388, %v1396
    %v1398 = vrot.slane %v527, 7
    %v1399 = vsel %vm115, %v1390, %v1398
    %v1400 = vrot.slane %v528, 7
    %v1401 = vsel %vm115, %v1392, %v1400
    %v1402 = vrot.slane %v529, 7
    %v1403 = vsel %vm115, %v1394, %v1402
    %v1404 = vrot.slane %v530, 7
    %v1405 = vsel %vm115, %v1396, %v1404
    %v1406 = vrot.slane %v531, 7
    %v1407 = vsel %vm115, %v1398, %v1406
    %v1408 = vrot.slane %v532, 7
    %v1409 = vsel %vm115, %v1400, %v1408
    %v1410 = vrot.slane %v533, 7
    %v1411 = vsel %vm115, %v1402, %v1410
    %v1412 = vrot.slane %v534, 7
    %v1413 = vsel %vm115, %v1404, %v1412
    %v1414 = vrot.slane %v535, 7
    %v1415 = vsel %vm115, %v1406, %v1414
    %v1416 = vrot.slane %v536, 7
    %v1417 = vsel %vm115, %v1408, %v1416
    %v1418 = vrot.slane %v537, 7
    %v1419 = vsel %vm115, %v1410, %v1418
    %v1420 = vrot.slane %v538, 7
    %v1421 = vsel %vm115, %v1412, %v1420
    %v1422 = vrot.slane %v539, 7
    %v1423 = vsel %vm115, %v1414, %v1422
    %v1424 = vrot.slane %v540, 7
    %v1425 = vsel %vm115, %v1416, %v1424
    %v1426 = vrot.slane %v541, 7
    %v1427 = vsel %vm115, %v1418, %v1426
    %v1428 = vrot.slane %v542, 7
    %v1429 = vsel %vm115, %v1420, %v1428
    %v1430 = vrot.slane %v543, 7
    %v1431 = vsel %vm115, %v1422, %v1430
    %v1432 = vrot.slane %v544, 7
    %v1433 = vsel %vm115, %v1424, %v1432
    %v1434 = vrot.slane %v545, 7
    %v1435 = vsel %vm115, %v1426, %v1434
    %v1436 = vrot.slane %v546, 7
    %v1437 = vsel %vm115, %v1428, %v1436
    %v1438 = vrot.slane %v547, 7
    %v1439 = vsel %vm115, %v1430, %v1438
    %v1440 = vrot.slane %v548, 7
    %v1441 = vrot.slane %v549, 7
    %v1442 = vrot.slane %v550, 7
    %v1443 = vrot.slane %v551, 7
    %v1444 = vrot.slane %v552, 7
    %v1445 = vsel %vm115, %v1440, %v1444
    %v1446 = vrot.slane %v553, 7
    %v1447 = vsel %vm115, %v1441, %v1446
    %v1448 = vrot.slane %v554, 7
    %v1449 = vsel %vm115, %v1442, %v1448
    %v1450 = vrot.slane %v555, 7
    %v1451 = vsel %vm115, %v1443, %v1450
    %v1452 = vrot.slane %v556, 7
    %v1453 = vsel %vm115, %v1444, %v1452
    %v1454 = vrot.slane %v557, 7
    %v1455 = vsel %vm115, %v1446, %v1454
    %v1456 = vrot.slane %v558, 7
    %v1457 = vsel %vm115, %v1448, %v1456
    %v1458 = vrot.slane %v559, 7
    %v1459 = vsel %vm115, %v1450, %v1458
    %v1460 = vrot.slane %v560, 7
    %v1461 = vsel %vm115, %v1452, %v1460
    %v1462 = vrot.slane %v561, 7
    %v1463 = vsel %vm115, %v1454, %v1462
    %v1464 = vrot.slane %v562, 7
    %v1465 = vsel %vm115, %v1456, %v1464
    %v1466 = vrot.slane %v563, 7
    %v1467 = vsel %vm115, %v1458, %v1466
    %v1468 = vrot.slane %v564, 7
    %v1469 = vsel %vm115, %v1460, %v1468
    %v1470 = vrot.slane %v565, 7
    %v1471 = vsel %vm115, %v1462, %v1470
    %v1472 = vrot.slane %v566, 7
    %v1473 = vsel %vm115, %v1464, %v1472
    %v1474 = vrot.slane %v567, 7
    %v1475 = vsel %vm115, %v1466, %v1474
    %v1476 = vrot.slane %v568, 7
    %v1477 = vsel %vm115, %v1468, %v1476
    %v1478 = vrot.slane %v569, 7
    %v1479 = vsel %vm115, %v1470, %v1478
    %v1480 = vrot.slane %v570, 7
    %v1481 = vsel %vm115, %v1472, %v1480
    %v1482 = vrot.slane %v571, 7
    %v1483 = vsel %vm115, %v1474, %v1482
    %v1484 = vrot.slane %v572, 7
    %v1485 = vsel %vm115, %v1476, %v1484
    %v1486 = vrot.slane %v573, 7
    %v1487 = vsel %vm115, %v1478, %v1486
    %v1488 = vrot.slane %v574, 7
    %v1489 = vsel %vm115, %v1480, %v1488
    %v1490 = vrot.slane %v575, 7
    %v1491 = vsel %vm115, %v1482, %v1490
    %v1492 = vrot.slane %v576, 7
    %v1493 = vsel %vm115, %v1484, %v1492
    %v1494 = vrot.slane %v577, 7
    %v1495 = vsel %vm115, %v1486, %v1494
    %v1496 = vrot.slane %v578, 7
    %v1497 = vsel %vm115, %v1488, %v1496
    %v1498 = vrot.slane %v579, 7
    %v1499 = vsel %vm115, %v1490, %v1498
    %1820 = vst [vmem:[#allocation8 + $0x40] sm:$0xfe] %v900
    %1821 = vst [vmem:[#allocation8 + $0x48] sm:$0xfe] %v901
    %1822 = vst [vmem:[#allocation8 + $0x50] sm:$0xfe] %v902
    %1823 = vst [vmem:[#allocation8 + $0x58] sm:$0xfe] %v903
    %1824 = vst [vmem:[#allocation8 + $0x60] sm:$0xff] %v905
    %1825 = vst [vmem:[#allocation8 + $0x68] sm:$0xff] %v907
    %1826 = vst [vmem:[#allocation8 + $0x70] sm:$0xff] %v909
    %1827 = vst [vmem:[#allocation8 + $0x78] sm:$0xff] %v911
    %1828 = vst [vmem:[#allocation8 + $0x80] sm:$0xff] %v913
    %1829 = vst [vmem:[#allocation8 + $0x88] sm:$0xff] %v915
    %1830 = vst [vmem:[#allocation8 + $0x90] sm:$0xff] %v917
    %1831 = vst [vmem:[#allocation8 + $0x98] sm:$0xff] %v919
    %1832 = vst [vmem:[#allocation8 + $0xa0] sm:$0xff] %v921
    %1833 = vst [vmem:[#allocation8 + $0xa8] sm:$0xff] %v923
    %1834 = vst [vmem:[#allocation8 + $0xb0] sm:$0xff] %v925
    %1835 = vst [vmem:[#allocation8 + $0xb8] sm:$0xff] %v927
    %1836 = vst [vmem:[#allocation8 + $0xc0] sm:$0xff] %v929
    %1837 = vst [vmem:[#allocation8 + $0xc8] sm:$0xff] %v931
    %1838 = vst [vmem:[#allocation8 + $0xd0] sm:$0xff] %v933
    %1839 = vst [vmem:[#allocation8 + $0xd8] sm:$0xff] %v935
    %1840 = vst [vmem:[#allocation8 + $0xe0] sm:$0xff] %v937
    %1841 = vst [vmem:[#allocation8 + $0xe8] sm:$0xff] %v939
    %1842 = vst [vmem:[#allocation8 + $0xf0] sm:$0xff] %v941
    %1843 = vst [vmem:[#allocation8 + $0xf8] sm:$0xff] %v943
    %1844 = vst [vmem:[#allocation8 + $0x100] sm:$0xff] %v945
    %1845 = vst [vmem:[#allocation8 + $0x108] sm:$0xff] %v947
    %1846 = vst [vmem:[#allocation8 + $0x110] sm:$0xff] %v949
    %1847 = vst [vmem:[#allocation8 + $0x118] sm:$0xff] %v951
    %1848 = vst [vmem:[#allocation8 + $0x120] sm:$0x1f] %v953
    %1849 = vst [vmem:[#allocation8 + $0x128] sm:$0x1f] %v955
    %1850 = vst [vmem:[#allocation8 + $0x130] sm:$0x1f] %v957
    %1851 = vst [vmem:[#allocation8 + $0x138] sm:$0x1f] %v959
    %1852 = vst [vmem:[#allocation8 + $0x180] sm:$0xfe] %v960
    %1853 = vst [vmem:[#allocation8 + $0x188] sm:$0xfe] %v961
    %1854 = vst [vmem:[#allocation8 + $0x190] sm:$0xfe] %v962
    %1855 = vst [vmem:[#allocation8 + $0x198] sm:$0xfe] %v963
    %1856 = vst [vmem:[#allocation8 + $0x1a0] sm:$0xff] %v965
    %1857 = vst [vmem:[#allocation8 + $0x1a8] sm:$0xff] %v967
    %1858 = vst [vmem:[#allocation8 + $0x1b0] sm:$0xff] %v969
    %1859 = vst [vmem:[#allocation8 + $0x1b8] sm:$0xff] %v971
    %1860 = vst [vmem:[#allocation8 + $0x1c0] sm:$0xff] %v973
    %1861 = vst [vmem:[#allocation8 + $0x1c8] sm:$0xff] %v975
    %1862 = vst [vmem:[#allocation8 + $0x1d0] sm:$0xff] %v977
    %1863 = vst [vmem:[#allocation8 + $0x1d8] sm:$0xff] %v979
    %1864 = vst [vmem:[#allocation8 + $0x1e0] sm:$0xff] %v981
    %1865 = vst [vmem:[#allocation8 + $0x1e8] sm:$0xff] %v983
    %1866 = vst [vmem:[#allocation8 + $0x1f0] sm:$0xff] %v985
    %1867 = vst [vmem:[#allocation8 + $0x1f8] sm:$0xff] %v987
    %1868 = vst [vmem:[#allocation8 + $0x200] sm:$0xff] %v989
    %1869 = vst [vmem:[#allocation8 + $0x208] sm:$0xff] %v991
    %1870 = vst [vmem:[#allocation8 + $0x210] sm:$0xff] %v993
    %1871 = vst [vmem:[#allocation8 + $0x218] sm:$0xff] %v995
    %1872 = vst [vmem:[#allocation8 + $0x220] sm:$0xff] %v997
    %1873 = vst [vmem:[#allocation8 + $0x228] sm:$0xff] %v999
    %1874 = vst [vmem:[#allocation8 + $0x230] sm:$0xff] %v1001
    %1875 = vst [vmem:[#allocation8 + $0x238] sm:$0xff] %v1003
    %1876 = vst [vmem:[#allocation8 + $0x240] sm:$0xff] %v1005
    %1877 = vst [vmem:[#allocation8 + $0x248] sm:$0xff] %v1007
    %1878 = vst [vmem:[#allocation8 + $0x250] sm:$0xff] %v1009
    %1879 = vst [vmem:[#allocation8 + $0x258] sm:$0xff] %v1011
    %1880 = vst [vmem:[#allocation8 + $0x260] sm:$0x1f] %v1013
    %1881 = vst [vmem:[#allocation8 + $0x268] sm:$0x1f] %v1015
    %1882 = vst [vmem:[#allocation8 + $0x270] sm:$0x1f] %v1017
    %1883 = vst [vmem:[#allocation8 + $0x278] sm:$0x1f] %v1019
    %1884 = vst [vmem:[#allocation8 + $0x2c0] sm:$0xfe] %v1020
    %1885 = vst [vmem:[#allocation8 + $0x2c8] sm:$0xfe] %v1021
    %1886 = vst [vmem:[#allocation8 + $0x2d0] sm:$0xfe] %v1022
    %1887 = vst [vmem:[#allocation8 + $0x2d8] sm:$0xfe] %v1023
    %1888 = vst [vmem:[#allocation8 + $0x2e0] sm:$0xff] %v1025
    %1889 = vst [vmem:[#allocation8 + $0x2e8] sm:$0xff] %v1027
    %1890 = vst [vmem:[#allocation8 + $0x2f0] sm:$0xff] %v1029
    %1891 = vst [vmem:[#allocation8 + $0x2f8] sm:$0xff] %v1031
    %1892 = vst [vmem:[#allocation8 + $0x300] sm:$0xff] %v1033
    %1893 = vst [vmem:[#allocation8 + $0x308] sm:$0xff] %v1035
    %1894 = vst [vmem:[#allocation8 + $0x310] sm:$0xff] %v1037
    %1895 = vst [vmem:[#allocation8 + $0x318] sm:$0xff] %v1039
    %1896 = vst [vmem:[#allocation8 + $0x320] sm:$0xff] %v1041
    %1897 = vst [vmem:[#allocation8 + $0x328] sm:$0xff] %v1043
    %1898 = vst [vmem:[#allocation8 + $0x330] sm:$0xff] %v1045
    %1899 = vst [vmem:[#allocation8 + $0x338] sm:$0xff] %v1047
    %1900 = vst [vmem:[#allocation8 + $0x340] sm:$0xff] %v1049
    %1901 = vst [vmem:[#allocation8 + $0x348] sm:$0xff] %v1051
    %1902 = vst [vmem:[#allocation8 + $0x350] sm:$0xff] %v1053
    %1903 = vst [vmem:[#allocation8 + $0x358] sm:$0xff] %v1055
    %1904 = vst [vmem:[#allocation8 + $0x360] sm:$0xff] %v1057
    %1905 = vst [vmem:[#allocation8 + $0x368] sm:$0xff] %v1059
    %1906 = vst [vmem:[#allocation8 + $0x370] sm:$0xff] %v1061
    %1907 = vst [vmem:[#allocation8 + $0x378] sm:$0xff] %v1063
    %1908 = vst [vmem:[#allocation8 + $0x380] sm:$0xff] %v1065
    %1909 = vst [vmem:[#allocation8 + $0x388] sm:$0xff] %v1067
    %1910 = vst [vmem:[#allocation8 + $0x390] sm:$0xff] %v1069
    %1911 = vst [vmem:[#allocation8 + $0x398] sm:$0xff] %v1071
    %1912 = vst [vmem:[#allocation8 + $0x3a0] sm:$0x1f] %v1073
    %1913 = vst [vmem:[#allocation8 + $0x3a8] sm:$0x1f] %v1075
    %1914 = vst [vmem:[#allocation8 + $0x3b0] sm:$0x1f] %v1077
    %1915 = vst [vmem:[#allocation8 + $0x3b8] sm:$0x1f] %v1079
    %1916 = vst [vmem:[#allocation8 + $0x400] sm:$0xfe] %v1080
    %1917 = vst [vmem:[#allocation8 + $0x408] sm:$0xfe] %v1081
    %1918 = vst [vmem:[#allocation8 + $0x410] sm:$0xfe] %v1082
    %1919 = vst [vmem:[#allocation8 + $0x418] sm:$0xfe] %v1083
    %1920 = vst [vmem:[#allocation8 + $0x420] sm:$0xff] %v1085
    %1921 = vst [vmem:[#allocation8 + $0x428] sm:$0xff] %v1087
    %1922 = vst [vmem:[#allocation8 + $0x430] sm:$0xff] %v1089
    %1923 = vst [vmem:[#allocation8 + $0x438] sm:$0xff] %v1091
    %1924 = vst [vmem:[#allocation8 + $0x440] sm:$0xff] %v1093
    %1925 = vst [vmem:[#allocation8 + $0x448] sm:$0xff] %v1095
    %1926 = vst [vmem:[#allocation8 + $0x450] sm:$0xff] %v1097
    %1927 = vst [vmem:[#allocation8 + $0x458] sm:$0xff] %v1099
    %1928 = vst [vmem:[#allocation8 + $0x460] sm:$0xff] %v1101
    %1929 = vst [vmem:[#allocation8 + $0x468] sm:$0xff] %v1103
    %1930 = vst [vmem:[#allocation8 + $0x470] sm:$0xff] %v1105
    %1931 = vst [vmem:[#allocation8 + $0x478] sm:$0xff] %v1107
    %1932 = vst [vmem:[#allocation8 + $0x480] sm:$0xff] %v1109
    %1933 = vst [vmem:[#allocation8 + $0x488] sm:$0xff] %v1111
    %1934 = vst [vmem:[#allocation8 + $0x490] sm:$0xff] %v1113
    %1935 = vst [vmem:[#allocation8 + $0x498] sm:$0xff] %v1115
    %1936 = vst [vmem:[#allocation8 + $0x4a0] sm:$0xff] %v1117
    %1937 = vst [vmem:[#allocation8 + $0x4a8] sm:$0xff] %v1119
    %1938 = vst [vmem:[#allocation8 + $0x4b0] sm:$0xff] %v1121
    %1939 = vst [vmem:[#allocation8 + $0x4b8] sm:$0xff] %v1123
    %1940 = vst [vmem:[#allocation8 + $0x4c0] sm:$0xff] %v1125
    %1941 = vst [vmem:[#allocation8 + $0x4c8] sm:$0xff] %v1127
    %1942 = vst [vmem:[#allocation8 + $0x4d0] sm:$0xff] %v1129
    %1943 = vst [vmem:[#allocation8 + $0x4d8] sm:$0xff] %v1131
    %1944 = vst [vmem:[#allocation8 + $0x4e0] sm:$0x1f] %v1133
    %1945 = vst [vmem:[#allocation8 + $0x4e8] sm:$0x1f] %v1135
    %1946 = vst [vmem:[#allocation8 + $0x4f0] sm:$0x1f] %v1137
    %1947 = vst [vmem:[#allocation8 + $0x4f8] sm:$0x1f] %v1139
    %1948 = vst [vmem:[#allocation8 + $0x540] sm:$0xfe] %v1140
    %1949 = vst [vmem:[#allocation8 + $0x548] sm:$0xfe] %v1141
    %1950 = vst [vmem:[#allocation8 + $0x550] sm:$0xfe] %v1142
    %1951 = vst [vmem:[#allocation8 + $0x558] sm:$0xfe] %v1143
    %1952 = vst [vmem:[#allocation8 + $0x560] sm:$0xff] %v1145
    %1953 = vst [vmem:[#allocation8 + $0x568] sm:$0xff] %v1147
    %1954 = vst [vmem:[#allocation8 + $0x570] sm:$0xff] %v1149
    %1955 = vst [vmem:[#allocation8 + $0x578] sm:$0xff] %v1151
    %1956 = vst [vmem:[#allocation8 + $0x580] sm:$0xff] %v1153
    %1957 = vst [vmem:[#allocation8 + $0x588] sm:$0xff] %v1155
    %1958 = vst [vmem:[#allocation8 + $0x590] sm:$0xff] %v1157
    %1959 = vst [vmem:[#allocation8 + $0x598] sm:$0xff] %v1159
    %1960 = vst [vmem:[#allocation8 + $0x5a0] sm:$0xff] %v1161
    %1961 = vst [vmem:[#allocation8 + $0x5a8] sm:$0xff] %v1163
    %1962 = vst [vmem:[#allocation8 + $0x5b0] sm:$0xff] %v1165
    %1963 = vst [vmem:[#allocation8 + $0x5b8] sm:$0xff] %v1167
    %1964 = vst [vmem:[#allocation8 + $0x5c0] sm:$0xff] %v1169
    %1965 = vst [vmem:[#allocation8 + $0x5c8] sm:$0xff] %v1171
    %1966 = vst [vmem:[#allocation8 + $0x5d0] sm:$0xff] %v1173
    %1967 = vst [vmem:[#allocation8 + $0x5d8] sm:$0xff] %v1175
    %1968 = vst [vmem:[#allocation8 + $0x5e0] sm:$0xff] %v1177
    %1969 = vst [vmem:[#allocation8 + $0x5e8] sm:$0xff] %v1179
    %1970 = vst [vmem:[#allocation8 + $0x5f0] sm:$0xff] %v1181
    %1971 = vst [vmem:[#allocation8 + $0x5f8] sm:$0xff] %v1183
    %1972 = vst [vmem:[#allocation8 + $0x600] sm:$0xff] %v1185
    %1973 = vst [vmem:[#allocation8 + $0x608] sm:$0xff] %v1187
    %1974 = vst [vmem:[#allocation8 + $0x610] sm:$0xff] %v1189
    %1975 = vst [vmem:[#allocation8 + $0x618] sm:$0xff] %v1191
    %1976 = vst [vmem:[#allocation8 + $0x620] sm:$0x1f] %v1193
    %1977 = vst [vmem:[#allocation8 + $0x628] sm:$0x1f] %v1195
    %1978 = vst [vmem:[#allocation8 + $0x630] sm:$0x1f] %v1197
    %1979 = vst [vmem:[#allocation8 + $0x638] sm:$0x1f] %v1199
    %1980 = vst [vmem:[#allocation8 + $0x680] sm:$0xfe] %v1200
    %1981 = vst [vmem:[#allocation8 + $0x688] sm:$0xfe] %v1201
    %1982 = vst [vmem:[#allocation8 + $0x690] sm:$0xfe] %v1202
    %1983 = vst [vmem:[#allocation8 + $0x698] sm:$0xfe] %v1203
    %1984 = vst [vmem:[#allocation8 + $0x6a0] sm:$0xff] %v1205
    %1985 = vst [vmem:[#allocation8 + $0x6a8] sm:$0xff] %v1207
    %1986 = vst [vmem:[#allocation8 + $0x6b0] sm:$0xff] %v1209
    %1987 = vst [vmem:[#allocation8 + $0x6b8] sm:$0xff] %v1211
    %1988 = vst [vmem:[#allocation8 + $0x6c0] sm:$0xff] %v1213
    %1989 = vst [vmem:[#allocation8 + $0x6c8] sm:$0xff] %v1215
    %1990 = vst [vmem:[#allocation8 + $0x6d0] sm:$0xff] %v1217
    %1991 = vst [vmem:[#allocation8 + $0x6d8] sm:$0xff] %v1219
    %1992 = vst [vmem:[#allocation8 + $0x6e0] sm:$0xff] %v1221
    %1993 = vst [vmem:[#allocation8 + $0x6e8] sm:$0xff] %v1223
    %1994 = vst [vmem:[#allocation8 + $0x6f0] sm:$0xff] %v1225
    %1995 = vst [vmem:[#allocation8 + $0x6f8] sm:$0xff] %v1227
    %1996 = vst [vmem:[#allocation8 + $0x700] sm:$0xff] %v1229
    %1997 = vst [vmem:[#allocation8 + $0x708] sm:$0xff] %v1231
    %1998 = vst [vmem:[#allocation8 + $0x710] sm:$0xff] %v1233
    %1999 = vst [vmem:[#allocation8 + $0x718] sm:$0xff] %v1235
    %2000 = vst [vmem:[#allocation8 + $0x720] sm:$0xff] %v1237
    %2001 = vst [vmem:[#allocation8 + $0x728] sm:$0xff] %v1239
    %2002 = vst [vmem:[#allocation8 + $0x730] sm:$0xff] %v1241
    %2003 = vst [vmem:[#allocation8 + $0x738] sm:$0xff] %v1243
    %2004 = vst [vmem:[#allocation8 + $0x740] sm:$0xff] %v1245
    %2005 = vst [vmem:[#allocation8 + $0x748] sm:$0xff] %v1247
    %2006 = vst [vmem:[#allocation8 + $0x750] sm:$0xff] %v1249
    %2007 = vst [vmem:[#allocation8 + $0x758] sm:$0xff] %v1251
    %2008 = vst [vmem:[#allocation8 + $0x760] sm:$0x1f] %v1253
    %2009 = vst [vmem:[#allocation8 + $0x768] sm:$0x1f] %v1255
    %2010 = vst [vmem:[#allocation8 + $0x770] sm:$0x1f] %v1257
    %2011 = vst [vmem:[#allocation8 + $0x778] sm:$0x1f] %v1259
    %2012 = vst [vmem:[#allocation8 + $0x7c0] sm:$0xfe] %v1260
    %2013 = vst [vmem:[#allocation8 + $0x7c8] sm:$0xfe] %v1261
    %2014 = vst [vmem:[#allocation8 + $0x7d0] sm:$0xfe] %v1262
    %2015 = vst [vmem:[#allocation8 + $0x7d8] sm:$0xfe] %v1263
    %2016 = vst [vmem:[#allocation8 + $0x7e0] sm:$0xff] %v1265
    %2017 = vst [vmem:[#allocation8 + $0x7e8] sm:$0xff] %v1267
    %2018 = vst [vmem:[#allocation8 + $0x7f0] sm:$0xff] %v1269
    %2019 = vst [vmem:[#allocation8 + $0x7f8] sm:$0xff] %v1271
    %2020 = vst [vmem:[#allocation8 + $0x800] sm:$0xff] %v1273
    %2021 = vst [vmem:[#allocation8 + $0x808] sm:$0xff] %v1275
    %2022 = vst [vmem:[#allocation8 + $0x810] sm:$0xff] %v1277
    %2023 = vst [vmem:[#allocation8 + $0x818] sm:$0xff] %v1279
    %2024 = vst [vmem:[#allocation8 + $0x820] sm:$0xff] %v1281
    %2025 = vst [vmem:[#allocation8 + $0x828] sm:$0xff] %v1283
    %2026 = vst [vmem:[#allocation8 + $0x830] sm:$0xff] %v1285
    %2027 = vst [vmem:[#allocation8 + $0x838] sm:$0xff] %v1287
    %2028 = vst [vmem:[#allocation8 + $0x840] sm:$0xff] %v1289
    %2029 = vst [vmem:[#allocation8 + $0x848] sm:$0xff] %v1291
    %2030 = vst [vmem:[#allocation8 + $0x850] sm:$0xff] %v1293
    %2031 = vst [vmem:[#allocation8 + $0x858] sm:$0xff] %v1295
    %2032 = vst [vmem:[#allocation8 + $0x860] sm:$0xff] %v1297
    %2033 = vst [vmem:[#allocation8 + $0x868] sm:$0xff] %v1299
    %2034 = vst [vmem:[#allocation8 + $0x870] sm:$0xff] %v1301
    %2035 = vst [vmem:[#allocation8 + $0x878] sm:$0xff] %v1303
    %2036 = vst [vmem:[#allocation8 + $0x880] sm:$0xff] %v1305
    %2037 = vst [vmem:[#allocation8 + $0x888] sm:$0xff] %v1307
    %2038 = vst [vmem:[#allocation8 + $0x890] sm:$0xff] %v1309
    %2039 = vst [vmem:[#allocation8 + $0x898] sm:$0xff] %v1311
    %2040 = vst [vmem:[#allocation8 + $0x8a0] sm:$0x1f] %v1313
    %2041 = vst [vmem:[#allocation8 + $0x8a8] sm:$0x1f] %v1315
    %2042 = vst [vmem:[#allocation8 + $0x8b0] sm:$0x1f] %v1317
    %2043 = vst [vmem:[#allocation8 + $0x8b8] sm:$0x1f] %v1319
    %2044 = vst [vmem:[#allocation8 + $0x900] sm:$0xfe] %v1320
    %2045 = vst [vmem:[#allocation8 + $0x908] sm:$0xfe] %v1321
    %2046 = vst [vmem:[#allocation8 + $0x910] sm:$0xfe] %v1322
    %2047 = vst [vmem:[#allocation8 + $0x918] sm:$0xfe] %v1323
    %2048 = vst [vmem:[#allocation8 + $0x920] sm:$0xff] %v1325
    %2049 = vst [vmem:[#allocation8 + $0x928] sm:$0xff] %v1327
    %2050 = vst [vmem:[#allocation8 + $0x930] sm:$0xff] %v1329
    %2051 = vst [vmem:[#allocation8 + $0x938] sm:$0xff] %v1331
    %2052 = vst [vmem:[#allocation8 + $0x940] sm:$0xff] %v1333
    %2053 = vst [vmem:[#allocation8 + $0x948] sm:$0xff] %v1335
    %2054 = vst [vmem:[#allocation8 + $0x950] sm:$0xff] %v1337
    %2055 = vst [vmem:[#allocation8 + $0x958] sm:$0xff] %v1339
    %2056 = vst [vmem:[#allocation8 + $0x960] sm:$0xff] %v1341
    %2057 = vst [vmem:[#allocation8 + $0x968] sm:$0xff] %v1343
    %2058 = vst [vmem:[#allocation8 + $0x970] sm:$0xff] %v1345
    %2059 = vst [vmem:[#allocation8 + $0x978] sm:$0xff] %v1347
    %2060 = vst [vmem:[#allocation8 + $0x980] sm:$0xff] %v1349
    %2061 = vst [vmem:[#allocation8 + $0x988] sm:$0xff] %v1351
    %2062 = vst [vmem:[#allocation8 + $0x990] sm:$0xff] %v1353
    %2063 = vst [vmem:[#allocation8 + $0x998] sm:$0xff] %v1355
    %2064 = vst [vmem:[#allocation8 + $0x9a0] sm:$0xff] %v1357
    %2065 = vst [vmem:[#allocation8 + $0x9a8] sm:$0xff] %v1359
    %2066 = vst [vmem:[#allocation8 + $0x9b0] sm:$0xff] %v1361
    %2067 = vst [vmem:[#allocation8 + $0x9b8] sm:$0xff] %v1363
    %2068 = vst [vmem:[#allocation8 + $0x9c0] sm:$0xff] %v1365
    %2069 = vst [vmem:[#allocation8 + $0x9c8] sm:$0xff] %v1367
    %2070 = vst [vmem:[#allocation8 + $0x9d0] sm:$0xff] %v1369
    %2071 = vst [vmem:[#allocation8 + $0x9d8] sm:$0xff] %v1371
    %2072 = vst [vmem:[#allocation8 + $0x9e0] sm:$0x1f] %v1373
    %2073 = vst [vmem:[#allocation8 + $0x9e8] sm:$0x1f] %v1375
    %2074 = vst [vmem:[#allocation8 + $0x9f0] sm:$0x1f] %v1377
    %2075 = vst [vmem:[#allocation8 + $0x9f8] sm:$0x1f] %v1379
    %2076 = vst [vmem:[#allocation8 + $0xa40] sm:$0xfe] %v1380
    %2077 = vst [vmem:[#allocation8 + $0xa48] sm:$0xfe] %v1381
    %2078 = vst [vmem:[#allocation8 + $0xa50] sm:$0xfe] %v1382
    %2079 = vst [vmem:[#allocation8 + $0xa58] sm:$0xfe] %v1383
    %2080 = vst [vmem:[#allocation8 + $0xa60] sm:$0xff] %v1385
    %2081 = vst [vmem:[#allocation8 + $0xa68] sm:$0xff] %v1387
    %2082 = vst [vmem:[#allocation8 + $0xa70] sm:$0xff] %v1389
    %2083 = vst [vmem:[#allocation8 + $0xa78] sm:$0xff] %v1391
    %2084 = vst [vmem:[#allocation8 + $0xa80] sm:$0xff] %v1393
    %2085 = vst [vmem:[#allocation8 + $0xa88] sm:$0xff] %v1395
    %2086 = vst [vmem:[#allocation8 + $0xa90] sm:$0xff] %v1397
    %2087 = vst [vmem:[#allocation8 + $0xa98] sm:$0xff] %v1399
    %2088 = vst [vmem:[#allocation8 + $0xaa0] sm:$0xff] %v1401
    %2089 = vst [vmem:[#allocation8 + $0xaa8] sm:$0xff] %v1403
    %2090 = vst [vmem:[#allocation8 + $0xab0] sm:$0xff] %v1405
    %2091 = vst [vmem:[#allocation8 + $0xab8] sm:$0xff] %v1407
    %2092 = vst [vmem:[#allocation8 + $0xac0] sm:$0xff] %v1409
    %2093 = vst [vmem:[#allocation8 + $0xac8] sm:$0xff] %v1411
    %2094 = vst [vmem:[#allocation8 + $0xad0] sm:$0xff] %v1413
    %2095 = vst [vmem:[#allocation8 + $0xad8] sm:$0xff] %v1415
    %2096 = vst [vmem:[#allocation8 + $0xae0] sm:$0xff] %v1417
    %2097 = vst [vmem:[#allocation8 + $0xae8] sm:$0xff] %v1419
    %2098 = vst [vmem:[#allocation8 + $0xaf0] sm:$0xff] %v1421
    %2099 = vst [vmem:[#allocation8 + $0xaf8] sm:$0xff] %v1423
    %2100 = vst [vmem:[#allocation8 + $0xb00] sm:$0xff] %v1425
    %2101 = vst [vmem:[#allocation8 + $0xb08] sm:$0xff] %v1427
    %2102 = vst [vmem:[#allocation8 + $0xb10] sm:$0xff] %v1429
    %2103 = vst [vmem:[#allocation8 + $0xb18] sm:$0xff] %v1431
    %2104 = vst [vmem:[#allocation8 + $0xb20] sm:$0x1f] %v1433
    %2105 = vst [vmem:[#allocation8 + $0xb28] sm:$0x1f] %v1435
    %2106 = vst [vmem:[#allocation8 + $0xb30] sm:$0x1f] %v1437
    %2107 = vst [vmem:[#allocation8 + $0xb38] sm:$0x1f] %v1439
    %2108 = vst [vmem:[#allocation8 + $0xb80] sm:$0xfe] %v1440
    %2109 = vst [vmem:[#allocation8 + $0xb88] sm:$0xfe] %v1441
    %2110 = vst [vmem:[#allocation8 + $0xb90] sm:$0xfe] %v1442
    %2111 = vst [vmem:[#allocation8 + $0xb98] sm:$0xfe] %v1443
    %2112 = vst [vmem:[#allocation8 + $0xba0] sm:$0xff] %v1445
    %2113 = vst [vmem:[#allocation8 + $0xba8] sm:$0xff] %v1447
    %2114 = vst [vmem:[#allocation8 + $0xbb0] sm:$0xff] %v1449
    %2115 = vst [vmem:[#allocation8 + $0xbb8] sm:$0xff] %v1451
    %2116 = vst [vmem:[#allocation8 + $0xbc0] sm:$0xff] %v1453
    %2117 = vst [vmem:[#allocation8 + $0xbc8] sm:$0xff] %v1455
    %2118 = vst [vmem:[#allocation8 + $0xbd0] sm:$0xff] %v1457
    %2119 = vst [vmem:[#allocation8 + $0xbd8] sm:$0xff] %v1459
    %2120 = vst [vmem:[#allocation8 + $0xbe0] sm:$0xff] %v1461
    %2121 = vst [vmem:[#allocation8 + $0xbe8] sm:$0xff] %v1463
    %2122 = vst [vmem:[#allocation8 + $0xbf0] sm:$0xff] %v1465
    %2123 = vst [vmem:[#allocation8 + $0xbf8] sm:$0xff] %v1467
    %2124 = vst [vmem:[#allocation8 + $0xc00] sm:$0xff] %v1469
    %2125 = vst [vmem:[#allocation8 + $0xc08] sm:$0xff] %v1471
    %2126 = vst [vmem:[#allocation8 + $0xc10] sm:$0xff] %v1473
    %2127 = vst [vmem:[#allocation8 + $0xc18] sm:$0xff] %v1475
    %2128 = vst [vmem:[#allocation8 + $0xc20] sm:$0xff] %v1477
    %2129 = vst [vmem:[#allocation8 + $0xc28] sm:$0xff] %v1479
    %2130 = vst [vmem:[#allocation8 + $0xc30] sm:$0xff] %v1481
    %2131 = vst [vmem:[#allocation8 + $0xc38] sm:$0xff] %v1483
    %2132 = vst [vmem:[#allocation8 + $0xc40] sm:$0xff] %v1485
    %2133 = vst [vmem:[#allocation8 + $0xc48] sm:$0xff] %v1487
    %2134 = vst [vmem:[#allocation8 + $0xc50] sm:$0xff] %v1489
    %2135 = vst [vmem:[#allocation8 + $0xc58] sm:$0xff] %v1491
    %2136 = vst [vmem:[#allocation8 + $0xc60] sm:$0x1f] %v1493
    %2137 = vst [vmem:[#allocation8 + $0xc68] sm:$0x1f] %v1495
    %2138 = vst [vmem:[#allocation8 + $0xc70] sm:$0x1f] %v1497
    %2139 = vst [vmem:[#allocation8 + $0xc78] sm:$0x1f] %v1499
    // Predicated region
    $region26: #{tpu_custom_call.1} parent=1 // pred_check
      _
    $region27: #{tpu_custom_call.1} parent=1 // pred_check_branch
      %2141 = sbr.rel (0) target = $region29
    $region28: #{tpu_custom_call.1} parent=1 // pred_region
      %s2143 = ssub.s32 51200, 51200
      %2144 = vsyncadd [#allocation4], %s2143
      %s2145 = sshll.u32 [#allocation8], 4
      %s2146 = int_to_ptr.vmem [resolvable:$true] %s2145
      %2151 = dma.vmem_to_hbm [thread:$0]  %s2146, 51200, %s3, [#allocation4], 512, 512, 32
    $region29: #{tpu_custom_call.1} parent=1 // pred_fallthru
      _
    // Predicated region
    $region30: #{tpu_custom_call.1} parent=1 // pred_check
      _
    $region31: #{tpu_custom_call.1} parent=1 // pred_check_branch
      %2153 = sbr.rel (0) target = $region33
    $region32: #{tpu_custom_call.1} parent=1 // pred_region
      %2154 = dma.done [#allocation4], 51200
    $region33: #{tpu_custom_call.1} parent=1 // pred_fallthru
      _
    %2155 = vsyncpa [#allocation3], 1
    %2156 = vsyncpa [#allocation6], 1
    %2157 = vsyncpa [#allocation4], 1

</llo_original>
